<compile_context>
chip_gen: v7x
topology: tpu7x:2x2x1
jax: 0.10.0
libtpu: 0.0.40
codegen_flags: <defaults>
</compile_context>

<pallas_src>
import functools

import jax
import jax.numpy as jnp
from jax.experimental import pallas as pl
from jax.experimental.pallas import tpu as pltpu

# MXU operand dtype: bf16 operands + f32 accumulation. Set to jnp.float32 for
# bit-exact validation against the PyTorch reference.
_MXU_DT = jnp.bfloat16
_BIO_PAD = 128    # lane padding for hidden2biotag emissions (num_bio -> 128)
_CLS_PAD = 128    # lane padding for the hidden2tag MLP layers (100 / 50 -> 128)
_PAIR_PAD = 8     # sublane padding for the 2 pair-logit planes (2 -> 8)


@functools.lru_cache(maxsize=None)
def _vmem_limit():
    """Per-generation VMEM budget: ~70% of physical (v5e/v6e: 128 MiB,
    v7x: 64 MiB), clamped; conservative fallback if the query fails."""
    try:
        cap = int(getattr(pltpu.get_tpu_info(), "vmem_capacity_bytes"))
    except Exception:
        cap = 64 * 1024 * 1024
    return max(32 * 1024 * 1024, min(int(cap * 0.7), 112 * 1024 * 1024))


def _row_tile(n_rows, bytes_per_row, cap_rows=1024):
    """Largest row tile that divides n_rows, is a multiple of 8 (or full), and
    keeps ~double-buffered row blocks inside a third of the VMEM budget."""
    budget = _vmem_limit() // 3
    tile = min(n_rows, cap_rows, max(8, budget // max(bytes_per_row, 1)))
    if tile >= n_rows:
        return n_rows
    tile = max(8, (tile // 8) * 8)
    while tile > 8 and n_rows % tile:
        tile -= 8
    return tile if n_rows % tile == 0 else n_rows


# ---------------------------------------------------------------------------
# Kernel 0: packed per-source-type projection  X @ [W_same | W_cross | W_self]
# ---------------------------------------------------------------------------
def _proj_kernel(x_ref, w_ref, o_ref):
    o_ref[...] = jnp.dot(x_ref[...].astype(w_ref.dtype), w_ref[...],
                         preferred_element_type=jnp.float32).astype(o_ref.dtype)


def pallas_proj(x, w_cat):
    """out = x @ w_cat, emitted in the MXU dtype so downstream relconv streams
    it without per-tile casts (hoists X@W out of the per-dst-tile grid body)."""
    n, h_in = x.shape
    n_out = w_cat.shape[1]
    row_bytes = (h_in * 4 + n_out * jnp.dtype(w_cat.dtype).itemsize) * 2
    tile_n = _row_tile(n, row_bytes)
    return pl.pallas_call(
        _proj_kernel,
        out_shape=jax.ShapeDtypeStruct((n, n_out), w_cat.dtype),
        grid=(n // tile_n,),
        in_specs=[pl.BlockSpec((tile_n, h_in), lambda i: (i, 0)),
                  pl.BlockSpec((h_in, n_out), lambda i: (0, 0))],
        out_specs=pl.BlockSpec((tile_n, n_out), lambda i: (i, 0)),
        compiler_params=pltpu.CompilerParams(
            dimension_semantics=("parallel",),
            vmem_limit_bytes=_vmem_limit()),
    )(x, w_cat)


# ---------------------------------------------------------------------------
# Kernel 1: RelGraphConvLayer aggregation for one destination node type
# ---------------------------------------------------------------------------
def _relconv_kernel(a1_ref, a2_ref, xw1_ref, xw2_ref, xws_ref, b_ref, o_ref):
    acc = jnp.dot(a1_ref[...], xw1_ref[...], preferred_element_type=jnp.float32)
    acc = acc + jnp.dot(a2_ref[...], xw2_ref[...],
                        preferred_element_type=jnp.float32)
    acc = acc + xws_ref[...].astype(jnp.float32) + b_ref[...]
    o_ref[...] = jnp.maximum(acc, 0.0).astype(o_ref.dtype)


def pallas_relconv(a1, a2, xw_src1, col1, xw_src2, col2, xw_dst, bias):
    """out = ReLU(A1 @ XW1 + A2 @ XW2 + XW_self + bias).

    XW* are the pre-projected packed (n_src, 3H) arrays from `pallas_proj`;
    `colX` picks which H-wide column block is streamed via the BlockSpec, so no
    matmul / concat / cast is re-executed per destination tile.  The sl-*
    relations have identity adjacency (degree-1 self loops), so A_sl @ (X W_sl)
    == X W_sl and their adjacency matmul is skipped entirely.
    GraphConv norm='right' normalization is pre-folded into A (linearity).
    Requires hidden % 128 == 0 (lane-blocked weight-column selection).
    """
    n_dst, n_src1 = a1.shape
    n_src2 = a2.shape[1]
    h = bias.shape[0]
    itemsize = jnp.dtype(a1.dtype).itemsize
    row_bytes = ((n_src1 + n_src2) * itemsize + h * itemsize + h * 4) * 2
    tile_dst = _row_tile(n_dst, row_bytes, cap_rows=512)
    return pl.pallas_call(
        _relconv_kernel,
        out_shape=jax.ShapeDtypeStruct((n_dst, h), jnp.float32),
        grid=(n_dst // tile_dst,),
        in_specs=[
            pl.BlockSpec((tile_dst, n_src1), lambda i: (i, 0)),
            pl.BlockSpec((tile_dst, n_src2), lambda i: (i, 0)),
            pl.BlockSpec((n_src1, h), lambda i: (0, col1)),   # resident
            pl.BlockSpec((n_src2, h), lambda i: (0, col2)),   # resident
            pl.BlockSpec((tile_dst, h), lambda i: (i, 2)),    # self-loop column
            pl.BlockSpec((1, h), lambda i: (0, 0)),
        ],
        out_specs=pl.BlockSpec((tile_dst, h), lambda i: (i, 0)),
        compiler_params=pltpu.CompilerParams(
            dimension_semantics=("parallel",),
            vmem_limit_bytes=_vmem_limit()),
    )(a1, a2, xw_src1, xw_src2, xw_dst, bias.reshape(1, h))


# ---------------------------------------------------------------------------
# Kernel 2: residual + LayerNorm + RoPE + table projection + hidden2biotag
#           (review and reply fused into one call; grid = (side, batch))
# ---------------------------------------------------------------------------
def _ln_rope_proj_bio_kernel(lstm_ref, gcn_ref, gamma_ref, beta_ref,
                             cos_ref, sin_ref, wproj_ref, bproj_ref,
                             wbio_ref, bbio_ref, proj_ref, crf_ref):
    x = lstm_ref[0, 0] + gcn_ref[0, 0]                        # (S, H) residual
    mu = jnp.mean(x, axis=-1, keepdims=True)
    var = jnp.mean((x - mu) ** 2, axis=-1, keepdims=True)
    y = (x - mu) * jax.lax.rsqrt(var + 1e-5) * gamma_ref[0] + beta_ref[0]

    # hidden2biotag acts on the pre-RoPE LayerNorm output (matches reference).
    crf = jnp.dot(y.astype(wbio_ref.dtype), wbio_ref[...],
                  preferred_element_type=jnp.float32) + bbio_ref[...]
    crf_ref[0, 0] = crf.astype(crf_ref.dtype)

    # Interleaved RoPE: y_rot[2k] = -y[2k+1], y_rot[2k+1] = y[2k].  Exact via
    # two XLU lane rolls + a parity select (no HxH table, no MXU work).
    h = y.shape[-1]
    lane = jax.lax.broadcasted_iota(jnp.int32, y.shape, dimension=1)
    even = (lane % 2) == 0
    y_rot = jnp.where(even, -pltpu.roll(y, h - 1, 1), pltpu.roll(y, 1, 1))
    y_rope = y * cos_ref[...] + y_rot * sin_ref[...]

    # Table-transform projection (W_rev for side 0, W_rep for side 1); the
    # table bias is folded into side 0's projection bias.
    p = jnp.dot(y_rope.astype(wproj_ref.dtype), wproj_ref[0],
                preferred_element_type=jnp.float32) + bproj_ref[0]
    proj_ref[0, 0] = p.astype(proj_ref.dtype)


def pallas_ln_rope_proj_bio(lstm_s, gcn_s, gamma_s, beta_s, cos, sin,
                            wproj_s, bproj_s, wbio, bbio):
    _, B, S, H = lstm_s.shape
    N = wproj_s.shape[-1]
    NB = wbio.shape[-1]
    return pl.pallas_call(
        _ln_rope_proj_bio_kernel,
        out_shape=(jax.ShapeDtypeStruct((2, B, S, N), jnp.float32),
                   jax.ShapeDtypeStruct((2, B, S, NB), jnp.float32)),
        grid=(2, B),
        in_specs=[
            pl.BlockSpec((1, 1, S, H), lambda s, b: (s, b, 0, 0)),
            pl.BlockSpec((1, 1, S, H), lambda s, b: (s, b, 0, 0)),
            pl.BlockSpec((1, 1, H), lambda s, b: (s, 0, 0)),
            pl.BlockSpec((1, 1, H), lambda s, b: (s, 0, 0)),
            pl.BlockSpec((S, H), lambda s, b: (0, 0)),
            pl.BlockSpec((S, H), lambda s, b: (0, 0)),
            pl.BlockSpec((1, H, N), lambda s, b: (s, 0, 0)),
            pl.BlockSpec((1, 1, N), lambda s, b: (s, 0, 0)),
            pl.BlockSpec((H, NB), lambda s, b: (0, 0)),
            pl.BlockSpec((1, NB), lambda s, b: (0, 0)),
        ],
        out_specs=(pl.BlockSpec((1, 1, S, N), lambda s, b: (s, b, 0, 0)),
                   pl.BlockSpec((1, 1, S, NB), lambda s, b: (s, b, 0, 0))),
        compiler_params=pltpu.CompilerParams(
            dimension_semantics=("parallel", "parallel"),
            vmem_limit_bytes=_vmem_limit()),
    )(lstm_s, gcn_s, gamma_s, beta_s, cos, sin, wproj_s, bproj_s, wbio, bbio)


# ---------------------------------------------------------------------------
# Kernel 3: PositionWisedTableEncoder grid ReLU + hidden2tag MLP (fully fused)
# ---------------------------------------------------------------------------
def _table_cls_kernel(revp_ref, repp_ref, w1_ref, b1_ref, w2_ref, b2_ref,
                      w3t_ref, b3t_ref, o_ref):
    revp = revp_ref[0]                                    # (TR, N) incl. b_tab
    repp = repp_ref[0]                                    # (P,  N)
    tr, n = revp.shape
    p = repp.shape[0]
    # grid_feature tile = ReLU(rev_proj[i] + rep_proj[j]); the (TR,P,N) cross
    # tensor never touches HBM (P is a sublane multiple -> layout-free reshape).
    g = jnp.maximum(revp[:, None, :] + repp[None, :, :], 0.0).reshape(tr * p, n)
    h = jnp.dot(g.astype(w1_ref.dtype), w1_ref[...],
                preferred_element_type=jnp.float32) + b1_ref[...]
    h = jnp.maximum(h, 0.0)
    h = jnp.dot(h.astype(w2_ref.dtype), w2_ref[...],
                preferred_element_type=jnp.float32) + b2_ref[...]
    h = jnp.maximum(h, 0.0)
    # Final layer stored transposed: (8, TR*P) with the pair axis lane-dense
    # instead of a 128-lane-padded 2-class axis (16x less HBM writeback).
    logits_t = jax.lax.dot_general(
        w3t_ref[...], h.astype(w3t_ref.dtype),
        dimension_numbers=(((1,), (1,)), ((), ())),
        preferred_element_type=jnp.float32) + b3t_ref[...]
    o_ref[0] = logits_t.astype(o_ref.dtype)


def pallas_table_cls(rev_proj, rep_proj, w1, b1, w2, b2, w3t, b3t):
    B, R, N = rev_proj.shape
    _, P, _ = rep_proj.shape
    N1, N2, C = w1.shape[1], w2.shape[1], w3t.shape[0]
    # Bound the live f32 intermediates (g + two MLP activations) per grid step
    # against the per-generation VMEM budget (v7x: 64 MiB physical).
    budget = _vmem_limit() // 2
    per_row = P * (N + N1 + N2 + C) * 4 * 2
    tile_r = max(1, min(R, budget // max(per_row, 1)))
    if tile_r < R:
        tile_r = max(8, (tile_r // 8) * 8)
        while tile_r > 8 and (R % tile_r or (tile_r * P) % 128):
            tile_r -= 8
        if R % tile_r or (tile_r * P) % 128:
            tile_r = R                         # fall back: one block per batch
    return pl.pallas_call(
        _table_cls_kernel,
        out_shape=jax.ShapeDtypeStruct((B, C, R * P), jnp.float32),
        grid=(B, R // tile_r),
        in_specs=[
            pl.BlockSpec((1, tile_r, N), lambda b, r: (b, r, 0)),
            pl.BlockSpec((1, P, N), lambda b, r: (b, 0, 0)),   # resident
            pl.BlockSpec((N, N1), lambda b, r: (0, 0)),
            pl.BlockSpec((1, N1), lambda b, r: (0, 0)),
            pl.BlockSpec((N1, N2), lambda b, r: (0, 0)),
            pl.BlockSpec((1, N2), lambda b, r: (0, 0)),
            pl.BlockSpec((C, N2), lambda b, r: (0, 0)),
            pl.BlockSpec((C, 1), lambda b, r: (0, 0)),
        ],
        out_specs=pl.BlockSpec((1, C, tile_r * P), lambda b, r: (b, 0, r)),
        compiler_params=pltpu.CompilerParams(
            dimension_semantics=("parallel", "parallel"),
            vmem_limit_bytes=_vmem_limit()),
    )(rev_proj, rep_proj, w1, b1, w2, b2, w3t, b3t)


# ---------------------------------------------------------------------------
# Plain-JAX glue (tiny constant tables / padding only)
# ---------------------------------------------------------------------------
def _pad(a, shape):
    return jnp.pad(a, [(0, t - s) for s, t in zip(a.shape, shape)])


def rope_tables(seq_len, hidden):
    """cos/sin tables reproducing HGAT.sinusoidal_position_embedding layout."""
    pos = jnp.arange(seq_len, dtype=jnp.float32)[:, None]
    inv = jnp.power(10000.0,
                    -2.0 * jnp.arange(hidden // 2, dtype=jnp.float32) / hidden)
    ang = pos * inv
    cos = jnp.repeat(jnp.cos(ang), 2, axis=-1)
    sin = jnp.repeat(jnp.sin(ang), 2, axis=-1)
    return cos, sin


def norm_right(a):
    """GraphConv(norm='right'): divide by in-degree (clamped to 1)."""
    deg = jnp.clip(jnp.sum(a, axis=1, keepdims=True), 1.0, None)
    return a / deg


# Relation order matches the module: ['v2v','b2b','v2b','b2v','sl-rep','sl-rev']
REL_IDX = {"v2v": 0, "b2b": 1, "v2b": 2, "b2v": 3, "sl-rep": 4, "sl-rev": 5}


def hgat_forward(params, review_lstm_feature, reply_lstm_feature, adjs):
    B, R, H = review_lstm_feature.shape
    _, P, _ = reply_lstm_feature.shape
    num_bio = params["biotag"]["w"].shape[1]
    mxu = _MXU_DT

    # ---- relational GCN stack ------------------------------------------------
    # Adjacency pre-cast once to the MXU dtype (halves streamed DMA bytes).
    a_v2v = adjs["v2v"].astype(mxu)
    a_b2v = adjs["b2v"].astype(mxu)
    a_b2b = adjs["b2b"].astype(mxu)
    a_v2b = adjs["v2b"].astype(mxu)

    feats_rev = review_lstm_feature.reshape(-1, H)
    feats_rep = reply_lstm_feature.reshape(-1, H)
    rev_sum = jnp.zeros_like(feats_rev)
    rep_sum = jnp.zeros_like(feats_rep)
    for layer in params["hgcn"]:
        W, b = layer["weight"], layer["bias"]
        # Pack the three weights each source ntype needs into one wide matmul:
        # columns [0:H] same-type, [H:2H] cross, [2H:3H] identity self-loop.
        w_rev_cat = jnp.concatenate(
            [W[REL_IDX["v2v"]], W[REL_IDX["v2b"]], W[REL_IDX["sl-rev"]]],
            axis=1).astype(mxu)
        w_rep_cat = jnp.concatenate(
            [W[REL_IDX["b2b"]], W[REL_IDX["b2v"]], W[REL_IDX["sl-rep"]]],
            axis=1).astype(mxu)
        rev_xw = pallas_proj(feats_rev, w_rev_cat)        # (n_rev, 3H) bf16
        rep_xw = pallas_proj(feats_rep, w_rep_cat)        # (n_rep, 3H) bf16
        new_rev = pallas_relconv(a_v2v, a_b2v, rev_xw, 0, rep_xw, 1, rev_xw, b)
        new_rep = pallas_relconv(a_b2b, a_v2b, rep_xw, 0, rev_xw, 1, rep_xw, b)
        feats_rev, feats_rep = new_rev, new_rep
        rev_sum = rev_sum + new_rev
        rep_sum = rep_sum + new_rep
    n_layers = float(len(params["hgcn"]))
    review_gcn = (rev_sum / n_layers).reshape(B, R, H)
    reply_gcn = (rep_sum / n_layers).reshape(B, P, H)

    # ---- fused residual + LayerNorm + RoPE + table projection + biotag -------
    S = max(R, P)

    def pad_seq(x):
        return jnp.pad(x, ((0, 0), (0, S - x.shape[1]), (0, 0)))

    lstm_s = jnp.stack([pad_seq(review_lstm_feature),
                        pad_seq(reply_lstm_feature)])
    gcn_s = jnp.stack([pad_seq(review_gcn), pad_seq(reply_gcn)])
    gamma_s = jnp.stack([params["review_ln"]["g"],
                         params["reply_ln"]["g"]])[:, None, :]
    beta_s = jnp.stack([params["review_ln"]["b"],
                        params["reply_ln"]["b"]])[:, None, :]
    cos, sin = rope_tables(S, H)

    w_tab = params["table"]["w"]                          # (2H, N)
    N = w_tab.shape[1]
    wproj_s = jnp.stack([w_tab[:H], w_tab[H:]]).astype(mxu)       # (2, H, N)
    bproj_s = jnp.stack([params["table"]["b"],
                         jnp.zeros_like(params["table"]["b"])])[:, None, :]

    wbio = _pad(params["biotag"]["w"], (H, _BIO_PAD)).astype(mxu)
    bbio = _pad(params["biotag"]["b"], (_BIO_PAD,)).reshape(1, _BIO_PAD)

    proj_s, crf_s = pallas_ln_rope_proj_bio(
        lstm_s, gcn_s, gamma_s, beta_s, cos, sin, wproj_s, bproj_s, wbio, bbio)

    review_crf_input = crf_s[0, :, :R, :num_bio]
    reply_crf_input = crf_s[1, :, :P, :num_bio]
    rev_proj = proj_s[0, :, :R, :]
    rep_proj = proj_s[1, :, :P, :]

    # ---- fused table-grid ReLU + hidden2tag MLP -------------------------------
    w1 = _pad(params["cls"]["w1"], (N, _CLS_PAD)).astype(mxu)
    b1 = _pad(params["cls"]["b1"], (_CLS_PAD,)).reshape(1, _CLS_PAD)
    w2 = _pad(params["cls"]["w2"], (_CLS_PAD, _CLS_PAD)).astype(mxu)
    b2 = _pad(params["cls"]["b2"], (_CLS_PAD,)).reshape(1, _CLS_PAD)
    w3t = _pad(params["cls"]["w3"].T, (_PAIR_PAD, _CLS_PAD)).astype(mxu)
    b3t = _pad(params["cls"]["b3"].reshape(-1, 1), (_PAIR_PAD, 1))

    pair_t = pallas_table_cls(rev_proj, rep_proj, w1, b1, w2, b2, w3t, b3t)
    pair_output = jnp.transpose(
        pair_t[:, :2, :].reshape(B, 2, R, P), (0, 2, 3, 1))

    return pair_output, review_crf_input, reply_crf_input


# ---------------------------------------------------------------------------
# Deterministic parameter / input construction
# ---------------------------------------------------------------------------
def xavier_uniform(key, shape, gain=1.0):
    fan_in, fan_out = shape[-2], shape[-1]
    bound = gain * (6.0 / (fan_in + fan_out)) ** 0.5
    return jax.random.uniform(key, shape, jnp.float32, -bound, bound)


def make_params(key, hidden, num_layers, num_bio):
    relu_gain = 2.0 ** 0.5
    keys = jax.random.split(key, 16)
    hgcn = []
    for l in range(num_layers):
        hgcn.append(dict(
            weight=xavier_uniform(keys[l], (6, hidden, hidden), gain=relu_gain),
            bias=jnp.zeros((hidden,), jnp.float32),
        ))
    return dict(
        hgcn=hgcn,
        review_ln=dict(g=jnp.ones((hidden,), jnp.float32),
                       b=jnp.zeros((hidden,), jnp.float32)),
        reply_ln=dict(g=jnp.ones((hidden,), jnp.float32),
                      b=jnp.zeros((hidden,), jnp.float32)),
        table=dict(
            w=xavier_uniform(keys[4], (2 * hidden, hidden)),
            b=jnp.zeros((hidden,), jnp.float32),
        ),
        cls=dict(
            w1=xavier_uniform(keys[5], (hidden, 100)),
            b1=jnp.zeros((100,), jnp.float32),
            w2=xavier_uniform(keys[6], (100, 50)),
            b2=jnp.zeros((50,), jnp.float32),
            w3=xavier_uniform(keys[7], (50, 2)),
            b3=jnp.zeros((2,), jnp.float32),
        ),
        biotag=dict(
            w=xavier_uniform(keys[8], (hidden, num_bio)),
            b=jnp.zeros((num_bio,), jnp.float32),
        ),
    )


def make_graph(key, n_rev, n_rep):
    # sl-rev / sl-rep are identity self-loop relations (degree 1) in this graph,
    # so their aggregation A @ (X W) == X W and the adjacency is never built.
    k1, k2, k3, k4 = jax.random.split(key, 4)
    return {
        "v2v": norm_right(jax.random.bernoulli(k1, 0.3, (n_rev, n_rev)).astype(jnp.float32)),
        "b2b": norm_right(jax.random.bernoulli(k2, 0.3, (n_rep, n_rep)).astype(jnp.float32)),
        "v2b": norm_right(jax.random.bernoulli(k3, 0.3, (n_rep, n_rev)).astype(jnp.float32)),
        "b2v": norm_right(jax.random.bernoulli(k4, 0.3, (n_rev, n_rep)).astype(jnp.float32)),
    }


if __name__ == "__main__":
    B, REVIEW_LEN, REPLY_LEN, HIDDEN = 2, 8, 8, 128   # hidden = lane width
    NUM_LAYERS = 2          # args.layers
    NUM_BIO = 6             # len(crf_label2idx)

    root = jax.random.PRNGKey(0)
    k_par, k_rev, k_rep, k_graph = jax.random.split(root, 4)

    params = make_params(k_par, HIDDEN, NUM_LAYERS, NUM_BIO)
    review_lstm_feature = jax.random.normal(
        k_rev, (B, REVIEW_LEN, HIDDEN), jnp.float32)
    reply_lstm_feature = jax.random.normal(
        k_rep, (B, REPLY_LEN, HIDDEN), jnp.float32)
    adjs = make_graph(k_graph, B * REVIEW_LEN, B * REPLY_LEN)

    forward = jax.jit(hgat_forward)
    pair_output, review_crf_in, reply_crf_in = forward(
        params, review_lstm_feature, reply_lstm_feature, adjs
    )
    jax.block_until_ready((pair_output, review_crf_in, reply_crf_in))

    assert pair_output.shape == (B, REVIEW_LEN, REPLY_LEN, 2)
    assert review_crf_in.shape == (B, REVIEW_LEN, NUM_BIO)
    assert reply_crf_in.shape == (B, REPLY_LEN, NUM_BIO)
    assert bool(jnp.all(jnp.isfinite(pair_output)))
    assert bool(jnp.all(jnp.isfinite(review_crf_in)))
    assert bool(jnp.all(jnp.isfinite(reply_crf_in)))
    print("KERNEL_OK")
</pallas_src>

<mosaic_0001>
module attributes {stable_mosaic.version = 11 : i64} {
  func.func @_proj_kernel(%arg0: i32, %arg1: memref<16x128xf32, #tpu.memory_space<vmem>>, %arg2: memref<128x384xbf16, #tpu.memory_space<vmem>>, %arg3: memref<16x384xbf16, #tpu.memory_space<vmem>>) attributes {dimension_semantics = [#tpu.dimension_semantics<parallel>], iteration_bounds = array<i64: 1>, scalar_prefetch = 0 : i64, scratch_operands = 0 : i64, tpu.core_type = #tpu.core_type<tc>, window_params = [{transform_indices = @transform_0, window_bounds = array<i64: 16, 128>}, {pipeline_mode = #tpu.pipeline_mode<synchronous>, transform_indices = @transform_1, window_bounds = array<i64: 128, 384>}, {transform_indices = @transform_2, window_bounds = array<i64: 16, 384>}]} {
    %c0 = arith.constant 0 : index
    %c0_0 = arith.constant 0 : index
    %0 = vector.load %arg1[%c0, %c0_0] : memref<16x128xf32, #tpu.memory_space<vmem>>, vector<16x128xf32>
    %1 = arith.truncf %0 : vector<16x128xf32> to vector<16x128xbf16>
    %c0_1 = arith.constant 0 : index
    %c0_2 = arith.constant 0 : index
    %2 = vector.load %arg2[%c0_1, %c0_2] : memref<128x384xbf16, #tpu.memory_space<vmem>>, vector<128x384xbf16>
    %cst = arith.constant dense<0.000000e+00> : vector<16x384xf32>
    %3 = tpu.matmul %1, %2, %cst {dimension_numbers = #tpu.dot_dimension_numbers<[1], [0], [0], [1], [0, 0, 1, 1], [], []>} : vector<16x128xbf16>, vector<128x384xbf16>, vector<16x384xf32> -> vector<16x384xf32>
    %4 = arith.truncf %3 : vector<16x384xf32> to vector<16x384xbf16>
    %c0_3 = arith.constant 0 : index
    %c0_4 = arith.constant 0 : index
    %5 = vector.load %arg3[%c0_3, %c0_4] : memref<16x384xbf16, #tpu.memory_space<vmem>>, vector<16x384xbf16>
    tpu.vector_store %arg3[%c0_3, %c0_4], %4 {strides = array<i32>} : memref<16x384xbf16, #tpu.memory_space<vmem>>, vector<16x384xbf16>,
    return
  }
  func.func @transform_0(%arg0: i32) -> (i32, i32) {
    %c0_i32 = arith.constant 0 : i32
    %c0_i32_0 = arith.constant 0 : i32
    return %arg0, %c0_i32 : i32, i32
  }
  func.func @transform_1(%arg0: i32) -> (i32, i32) {
    %c0_i32 = arith.constant 0 : i32
    %c0_i32_0 = arith.constant 0 : i32
    %c0_i32_1 = arith.constant 0 : i32
    return %c0_i32, %c0_i32_0 : i32, i32
  }
  func.func @transform_2(%arg0: i32) -> (i32, i32) {
    %c0_i32 = arith.constant 0 : i32
    %c0_i32_0 = arith.constant 0 : i32
    return %arg0, %c0_i32 : i32, i32
  }
}

module attributes {stable_mosaic.version = 11 : i64} {
  func.func @_relconv_kernel(%arg0: i32, %arg1: memref<16x16xbf16, #tpu.memory_space<vmem>>, %arg2: memref<16x16xbf16, #tpu.memory_space<vmem>>, %arg3: memref<16x128xbf16, #tpu.memory_space<vmem>>, %arg4: memref<16x128xbf16, #tpu.memory_space<vmem>>, %arg5: memref<16x128xbf16, #tpu.memory_space<vmem>>, %arg6: memref<1x128xf32, #tpu.memory_space<vmem>>, %arg7: memref<16x128xf32, #tpu.memory_space<vmem>>) attributes {dimension_semantics = [#tpu.dimension_semantics<parallel>], iteration_bounds = array<i64: 1>, scalar_prefetch = 0 : i64, scratch_operands = 0 : i64, tpu.core_type = #tpu.core_type<tc>, window_params = [{transform_indices = @transform_0, window_bounds = array<i64: 16, 16>}, {transform_indices = @transform_1, window_bounds = array<i64: 16, 16>}, {transform_indices = @transform_2, window_bounds = array<i64: 16, 128>}, {transform_indices = @transform_3, window_bounds = array<i64: 16, 128>}, {transform_indices = @transform_4, window_bounds = array<i64: 16, 128>}, {pipeline_mode = #tpu.pipeline_mode<synchronous>, transform_indices = @transform_5, window_bounds = array<i64: 1, 128>}, {transform_indices = @transform_6, window_bounds = array<i64: 16, 128>}]} {
    %c0 = arith.constant 0 : index
    %c0_0 = arith.constant 0 : index
    %0 = vector.load %arg1[%c0, %c0_0] : memref<16x16xbf16, #tpu.memory_space<vmem>>, vector<16x16xbf16>
    %c0_1 = arith.constant 0 : index
    %c0_2 = arith.constant 0 : index
    %1 = vector.load %arg3[%c0_1, %c0_2] : memref<16x128xbf16, #tpu.memory_space<vmem>>, vector<16x128xbf16>
    %cst = arith.constant dense<0.000000e+00> : vector<16x128xf32>
    %2 = tpu.matmul %0, %1, %cst {dimension_numbers = #tpu.dot_dimension_numbers<[1], [0], [0], [1], [0, 0, 1, 1], [], []>} : vector<16x16xbf16>, vector<16x128xbf16>, vector<16x128xf32> -> vector<16x128xf32>
    %c0_3 = arith.constant 0 : index
    %c0_4 = arith.constant 0 : index
    %3 = vector.load %arg2[%c0_3, %c0_4] : memref<16x16xbf16, #tpu.memory_space<vmem>>, vector<16x16xbf16>
    %c0_5 = arith.constant 0 : index
    %c0_6 = arith.constant 0 : index
    %4 = vector.load %arg4[%c0_5, %c0_6] : memref<16x128xbf16, #tpu.memory_space<vmem>>, vector<16x128xbf16>
    %cst_7 = arith.constant dense<0.000000e+00> : vector<16x128xf32>
    %5 = tpu.matmul %3, %4, %cst_7 {dimension_numbers = #tpu.dot_dimension_numbers<[1], [0], [0], [1], [0, 0, 1, 1], [], []>} : vector<16x16xbf16>, vector<16x128xbf16>, vector<16x128xf32> -> vector<16x128xf32>
    %6 = arith.addf %2, %5 : vector<16x128xf32>
    %c0_8 = arith.constant 0 : index
    %c0_9 = arith.constant 0 : index
    %7 = vector.load %arg5[%c0_8, %c0_9] : memref<16x128xbf16, #tpu.memory_space<vmem>>, vector<16x128xbf16>
    %8 = arith.extf %7 : vector<16x128xbf16> to vector<16x128xf32>
    %9 = arith.addf %6, %8 : vector<16x128xf32>
    %c0_10 = arith.constant 0 : index
    %c0_11 = arith.constant 0 : index
    %10 = vector.load %arg6[%c0_10, %c0_11] : memref<1x128xf32, #tpu.memory_space<vmem>>, vector<1x128xf32>
    %11 = vector.broadcast %10 : vector<1x128xf32> to vector<16x128xf32>
    %12 = arith.addf %9, %11 : vector<16x128xf32>
    %cst_12 = arith.constant 0.000000e+00 : f32
    %13 = vector.broadcast %cst_12 : f32 to vector<16x128xf32>
    %14 = arith.maximumf %12, %13 : vector<16x128xf32>
    %c0_13 = arith.constant 0 : index
    %c0_14 = arith.constant 0 : index
    %15 = vector.load %arg7[%c0_13, %c0_14] : memref<16x128xf32, #tpu.memory_space<vmem>>, vector<16x128xf32>
    tpu.vector_store %arg7[%c0_13, %c0_14], %14 {strides = array<i32>} : memref<16x128xf32, #tpu.memory_space<vmem>>, vector<16x128xf32>,
    return
  }
  func.func @transform_0(%arg0: i32) -> (i32, i32) {
    %c0_i32 = arith.constant 0 : i32
    %c0_i32_0 = arith.constant 0 : i32
    return %arg0, %c0_i32 : i32, i32
  }
  func.func @transform_1(%arg0: i32) -> (i32, i32) {
    %c0_i32 = arith.constant 0 : i32
    %c0_i32_0 = arith.constant 0 : i32
    return %arg0, %c0_i32 : i32, i32
  }
  func.func @transform_2(%arg0: i32) -> (i32, i32) {
    %c0_i32 = arith.constant 0 : i32
    %c0_i32_0 = arith.constant 0 : i32
    %c0_i32_1 = arith.constant 0 : i32
    return %c0_i32, %c0_i32_0 : i32, i32
  }
  func.func @transform_3(%arg0: i32) -> (i32, i32) {
    %c0_i32 = arith.constant 0 : i32
    %c1_i32 = arith.constant 1 : i32
    %c0_i32_0 = arith.constant 0 : i32
    return %c0_i32, %c1_i32 : i32, i32
  }
  func.func @transform_4(%arg0: i32) -> (i32, i32) {
    %c2_i32 = arith.constant 2 : i32
    %c0_i32 = arith.constant 0 : i32
    return %arg0, %c2_i32 : i32, i32
  }
  func.func @transform_5(%arg0: i32) -> (i32, i32) {
    %c0_i32 = arith.constant 0 : i32
    %c0_i32_0 = arith.constant 0 : i32
    %c0_i32_1 = arith.constant 0 : i32
    return %c0_i32, %c0_i32_0 : i32, i32
  }
  func.func @transform_6(%arg0: i32) -> (i32, i32) {
    %c0_i32 = arith.constant 0 : i32
    %c0_i32_0 = arith.constant 0 : i32
    return %arg0, %c0_i32 : i32, i32
  }
}

module attributes {stable_mosaic.version = 11 : i64} {
  func.func @_ln_rope_proj_bio_kernel(%arg0: i32, %arg1: i32, %arg2: memref<1x1x8x128xf32, #tpu.memory_space<vmem>>, %arg3: memref<1x1x8x128xf32, #tpu.memory_space<vmem>>, %arg4: memref<1x1x128xf32, #tpu.memory_space<vmem>>, %arg5: memref<1x1x128xf32, #tpu.memory_space<vmem>>, %arg6: memref<8x128xf32, #tpu.memory_space<vmem>>, %arg7: memref<8x128xf32, #tpu.memory_space<vmem>>, %arg8: memref<1x128x128xbf16, #tpu.memory_space<vmem>>, %arg9: memref<1x1x128xf32, #tpu.memory_space<vmem>>, %arg10: memref<128x128xbf16, #tpu.memory_space<vmem>>, %arg11: memref<1x128xf32, #tpu.memory_space<vmem>>, %arg12: memref<1x1x8x128xf32, #tpu.memory_space<vmem>>, %arg13: memref<1x1x8x128xf32, #tpu.memory_space<vmem>>) attributes {dimension_semantics = [#tpu.dimension_semantics<parallel>, #tpu.dimension_semantics<parallel>], iteration_bounds = array<i64: 2, 2>, scalar_prefetch = 0 : i64, scratch_operands = 0 : i64, tpu.core_type = #tpu.core_type<tc>, window_params = [{transform_indices = @transform_0, window_bounds = array<i64: 1, 1, 8, 128>}, {transform_indices = @transform_1, window_bounds = array<i64: 1, 1, 8, 128>}, {transform_indices = @transform_2, window_bounds = array<i64: 1, 1, 128>}, {transform_indices = @transform_3, window_bounds = array<i64: 1, 1, 128>}, {pipeline_mode = #tpu.pipeline_mode<synchronous>, transform_indices = @transform_4, window_bounds = array<i64: 8, 128>}, {pipeline_mode = #tpu.pipeline_mode<synchronous>, transform_indices = @transform_5, window_bounds = array<i64: 8, 128>}, {transform_indices = @transform_6, window_bounds = array<i64: 1, 128, 128>}, {transform_indices = @transform_7, window_bounds = array<i64: 1, 1, 128>}, {pipeline_mode = #tpu.pipeline_mode<synchronous>, transform_indices = @transform_8, window_bounds = array<i64: 128, 128>}, {pipeline_mode = #tpu.pipeline_mode<synchronous>, transform_indices = @transform_9, window_bounds = array<i64: 1, 128>}, {transform_indices = @transform_10, window_bounds = array<i64: 1, 1, 8, 128>}, {transform_indices = @transform_11, window_bounds = array<i64: 1, 1, 8, 128>}]} {
    %c0 = arith.constant 0 : index
    %c0_0 = arith.constant 0 : index
    %c0_1 = arith.constant 0 : index
    %c0_2 = arith.constant 0 : index
    %0 = vector.load %arg2[%c0, %c0_0, %c0_1, %c0_2] : memref<1x1x8x128xf32, #tpu.memory_space<vmem>>, vector<1x1x8x128xf32>
    %1 = vector.shape_cast %0 : vector<1x1x8x128xf32> to vector<8x128xf32>
    %c0_3 = arith.constant 0 : index
    %c0_4 = arith.constant 0 : index
    %c0_5 = arith.constant 0 : index
    %c0_6 = arith.constant 0 : index
    %2 = vector.load %arg3[%c0_3, %c0_4, %c0_5, %c0_6] : memref<1x1x8x128xf32, #tpu.memory_space<vmem>>, vector<1x1x8x128xf32>
    %3 = vector.shape_cast %2 : vector<1x1x8x128xf32> to vector<8x128xf32>
    %4 = arith.addf %1, %3 : vector<8x128xf32>
    %cst = arith.constant dense<0.000000e+00> : vector<8xf32>
    %5 = vector.multi_reduction <add>, %4, %cst [1] : vector<8x128xf32> to vector<8xf32>
    %6 = vector.shape_cast %5 : vector<8xf32> to vector<8x1xf32>
    %cst_7 = arith.constant 1.280000e+02 : f32
    %7 = vector.broadcast %cst_7 : f32 to vector<8x1xf32>
    %8 = arith.divf %6, %7 : vector<8x1xf32>
    %9 = vector.broadcast %8 : vector<8x1xf32> to vector<8x128xf32>
    %10 = arith.subf %4, %9 : vector<8x128xf32>
    %11 = arith.mulf %10, %10 : vector<8x128xf32>
    %cst_8 = arith.constant dense<0.000000e+00> : vector<8xf32>
    %12 = vector.multi_reduction <add>, %11, %cst_8 [1] : vector<8x128xf32> to vector<8xf32>
    %13 = vector.shape_cast %12 : vector<8xf32> to vector<8x1xf32>
    %cst_9 = arith.constant 1.280000e+02 : f32
    %14 = vector.broadcast %cst_9 : f32 to vector<8x1xf32>
    %15 = arith.divf %13, %14 : vector<8x1xf32>
    %16 = vector.broadcast %8 : vector<8x1xf32> to vector<8x128xf32>
    %17 = arith.subf %4, %16 : vector<8x128xf32>
    %cst_10 = arith.constant 9.99999974E-6 : f32
    %18 = vector.broadcast %cst_10 : f32 to vector<8x1xf32>
    %19 = arith.addf %15, %18 : vector<8x1xf32>
    %20 = math.rsqrt %19 : vector<8x1xf32>
    %21 = vector.broadcast %20 : vector<8x1xf32> to vector<8x128xf32>
    %22 = arith.mulf %17, %21 : vector<8x128xf32>
    %c0_11 = arith.constant 0 : index
    %c0_12 = arith.constant 0 : index
    %c0_13 = arith.constant 0 : index
    %23 = vector.load %arg4[%c0_11, %c0_12, %c0_13] : memref<1x1x128xf32, #tpu.memory_space<vmem>>, vector<1x1x128xf32>
    %24 = vector.shape_cast %23 : vector<1x1x128xf32> to vector<1x128xf32>
    %25 = vector.broadcast %24 : vector<1x128xf32> to vector<8x128xf32>
    %26 = arith.mulf %22, %25 : vector<8x128xf32>
    %c0_14 = arith.constant 0 : index
    %c0_15 = arith.constant 0 : index
    %c0_16 = arith.constant 0 : index
    %27 = vector.load %arg5[%c0_14, %c0_15, %c0_16] : memref<1x1x128xf32, #tpu.memory_space<vmem>>, vector<1x1x128xf32>
    %28 = vector.shape_cast %27 : vector<1x1x128xf32> to vector<1x128xf32>
    %29 = vector.broadcast %28 : vector<1x128xf32> to vector<8x128xf32>
    %30 = arith.addf %26, %29 : vector<8x128xf32>
    %31 = arith.truncf %30 : vector<8x128xf32> to vector<8x128xbf16>
    %c0_17 = arith.constant 0 : index
    %c0_18 = arith.constant 0 : index
    %32 = vector.load %arg10[%c0_17, %c0_18] : memref<128x128xbf16, #tpu.memory_space<vmem>>, vector<128x128xbf16>
    %cst_19 = arith.constant dense<0.000000e+00> : vector<8x128xf32>
    %33 = tpu.matmul %31, %32, %cst_19 {dimension_numbers = #tpu.dot_dimension_numbers<[1], [0], [0], [1], [0, 0, 1, 1], [], []>} : vector<8x128xbf16>, vector<128x128xbf16>, vector<8x128xf32> -> vector<8x128xf32>
    %c0_20 = arith.constant 0 : index
    %c0_21 = arith.constant 0 : index
    %34 = vector.load %arg11[%c0_20, %c0_21] : memref<1x128xf32, #tpu.memory_space<vmem>>, vector<1x128xf32>
    %35 = vector.broadcast %34 : vector<1x128xf32> to vector<8x128xf32>
    %36 = arith.addf %33, %35 : vector<8x128xf32>
    %c0_22 = arith.constant 0 : index
    %c0_23 = arith.constant 0 : index
    %c0_24 = arith.constant 0 : index
    %c0_25 = arith.constant 0 : index
    %37 = vector.load %arg13[%c0_22, %c0_23, %c0_24, %c0_25] : memref<1x1x8x128xf32, #tpu.memory_space<vmem>>, vector<1x1x8x128xf32>
    %38 = vector.shape_cast %37 : vector<1x1x8x128xf32> to vector<8x128xf32>
    %39 = vector.shape_cast %36 : vector<8x128xf32> to vector<1x1x8x128xf32>
    tpu.vector_store %arg13[%c0_22, %c0_23, %c0_24, %c0_25], %39 {strides = array<i32>} : memref<1x1x8x128xf32, #tpu.memory_space<vmem>>, vector<1x1x8x128xf32>,
    %40 = tpu.iota {dimensions = array<i32: 1>} : vector<8x128xi32>
    %c2_i32 = arith.constant 2 : i32
    %c0_i32 = arith.constant 0 : i32
    %41 = arith.cmpi eq, %c2_i32, %c0_i32 : i32
    %c1_i32 = arith.constant 1 : i32
    %42 = arith.select %41, %c1_i32, %c2_i32 : i32
    %43 = vector.broadcast %42 : i32 to vector<8x128xi32>
    %44 = arith.remsi %40, %43 : vector<8x128xi32>
    %c0_i32_26 = arith.constant 0 : i32
    %45 = vector.broadcast %c0_i32_26 : i32 to vector<8x128xi32>
    %46 = arith.cmpi ne, %44, %45 : vector<8x128xi32>
    %c0_i32_27 = arith.constant 0 : i32
    %47 = vector.broadcast %c0_i32_27 : i32 to vector<8x128xi32>
    %48 = arith.cmpi slt, %44, %47 : vector<8x128xi32>
    %c0_i32_28 = arith.constant 0 : i32
    %49 = arith.cmpi slt, %42, %c0_i32_28 : i32
    %50 = vector.broadcast %49 : i1 to vector<8x128xi1>
    %51 = vector.broadcast %50 : vector<8x128xi1> to vector<8x128xi1>
    %52 = arith.xori %48, %51 : vector<8x128xi1>
    %53 = arith.andi %52, %46 : vector<8x128xi1>
    %54 = vector.broadcast %42 : i32 to vector<8x128xi32>
    %55 = arith.addi %44, %54 : vector<8x128xi32>
    %56 = arith.select %53, %55, %44 : vector<8x128xi1>, vector<8x128xi32>
    %c0_i32_29 = arith.constant 0 : i32
    %57 = vector.broadcast %c0_i32_29 : i32 to vector<8x128xi32>
    %58 = arith.cmpi eq, %56, %57 : vector<8x128xi32>
    %c127_i32 = arith.constant 127 : i32
    %59 = tpu.dynamic_rotate %30 by %c127_i32 dim 1 : vector<8x128xf32>, i32 -> vector<8x128xf32>
    %cst_30 = arith.constant 0.000000e+00 : f32
    %60 = vector.broadcast %cst_30 : f32 to vector<8x128xf32>
    %61 = arith.subf %60, %59 : vector<8x128xf32>
    %c1_i32_31 = arith.constant 1 : i32
    %62 = tpu.dynamic_rotate %30 by %c1_i32_31 dim 1 : vector<8x128xf32>, i32 -> vector<8x128xf32>
    %63 = arith.select %58, %61, %62 : vector<8x128xi1>, vector<8x128xf32>
    %c0_32 = arith.constant 0 : index
    %c0_33 = arith.constant 0 : index
    %64 = vector.load %arg6[%c0_32, %c0_33] : memref<8x128xf32, #tpu.memory_space<vmem>>, vector<8x128xf32>
    %65 = arith.mulf %30, %64 : vector<8x128xf32>
    %c0_34 = arith.constant 0 : index
    %c0_35 = arith.constant 0 : index
    %66 = vector.load %arg7[%c0_34, %c0_35] : memref<8x128xf32, #tpu.memory_space<vmem>>, vector<8x128xf32>
    %67 = arith.mulf %63, %66 : vector<8x128xf32>
    %68 = arith.addf %65, %67 : vector<8x128xf32>
    %69 = arith.truncf %68 : vector<8x128xf32> to vector<8x128xbf16>
    %c0_36 = arith.constant 0 : index
    %c0_37 = arith.constant 0 : index
    %c0_38 = arith.constant 0 : index
    %70 = vector.load %arg8[%c0_36, %c0_37, %c0_38] : memref<1x128x128xbf16, #tpu.memory_space<vmem>>, vector<1x128x128xbf16>
    %71 = vector.shape_cast %70 : vector<1x128x128xbf16> to vector<128x128xbf16>
    %cst_39 = arith.constant dense<0.000000e+00> : vector<8x128xf32>
    %72 = tpu.matmul %69, %71, %cst_39 {dimension_numbers = #tpu.dot_dimension_numbers<[1], [0], [0], [1], [0, 0, 1, 1], [], []>} : vector<8x128xbf16>, vector<128x128xbf16>, vector<8x128xf32> -> vector<8x128xf32>
    %c0_40 = arith.constant 0 : index
    %c0_41 = arith.constant 0 : index
    %c0_42 = arith.constant 0 : index
    %73 = vector.load %arg9[%c0_40, %c0_41, %c0_42] : memref<1x1x128xf32, #tpu.memory_space<vmem>>, vector<1x1x128xf32>
    %74 = vector.shape_cast %73 : vector<1x1x128xf32> to vector<1x128xf32>
    %75 = vector.broadcast %74 : vector<1x128xf32> to vector<8x128xf32>
    %76 = arith.addf %72, %75 : vector<8x128xf32>
    %c0_43 = arith.constant 0 : index
    %c0_44 = arith.constant 0 : index
    %c0_45 = arith.constant 0 : index
    %c0_46 = arith.constant 0 : index
    %77 = vector.load %arg12[%c0_43, %c0_44, %c0_45, %c0_46] : memref<1x1x8x128xf32, #tpu.memory_space<vmem>>, vector<1x1x8x128xf32>
    %78 = vector.shape_cast %77 : vector<1x1x8x128xf32> to vector<8x128xf32>
    %79 = vector.shape_cast %76 : vector<8x128xf32> to vector<1x1x8x128xf32>
    tpu.vector_store %arg12[%c0_43, %c0_44, %c0_45, %c0_46], %79 {strides = array<i32>} : memref<1x1x8x128xf32, #tpu.memory_space<vmem>>, vector<1x1x8x128xf32>,
    return
  }
  func.func @transform_0(%arg0: i32, %arg1: i32) -> (i32, i32, i32, i32) {
    %c0_i32 = arith.constant 0 : i32
    %c0_i32_0 = arith.constant 0 : i32
    %c0_i32_1 = arith.constant 0 : i32
    return %arg0, %arg1, %c0_i32, %c0_i32_0 : i32, i32, i32, i32
  }
  func.func @transform_1(%arg0: i32, %arg1: i32) -> (i32, i32, i32, i32) {
    %c0_i32 = arith.constant 0 : i32
    %c0_i32_0 = arith.constant 0 : i32
    %c0_i32_1 = arith.constant 0 : i32
    return %arg0, %arg1, %c0_i32, %c0_i32_0 : i32, i32, i32, i32
  }
  func.func @transform_2(%arg0: i32, %arg1: i32) -> (i32, i32, i32) {
    %c0_i32 = arith.constant 0 : i32
    %c0_i32_0 = arith.constant 0 : i32
    %c0_i32_1 = arith.constant 0 : i32
    return %arg0, %c0_i32, %c0_i32_0 : i32, i32, i32
  }
  func.func @transform_3(%arg0: i32, %arg1: i32) -> (i32, i32, i32) {
    %c0_i32 = arith.constant 0 : i32
    %c0_i32_0 = arith.constant 0 : i32
    %c0_i32_1 = arith.constant 0 : i32
    return %arg0, %c0_i32, %c0_i32_0 : i32, i32, i32
  }
  func.func @transform_4(%arg0: i32, %arg1: i32) -> (i32, i32) {
    %c0_i32 = arith.constant 0 : i32
    %c0_i32_0 = arith.constant 0 : i32
    %c0_i32_1 = arith.constant 0 : i32
    return %c0_i32, %c0_i32_0 : i32, i32
  }
  func.func @transform_5(%arg0: i32, %arg1: i32) -> (i32, i32) {
    %c0_i32 = arith.constant 0 : i32
    %c0_i32_0 = arith.constant 0 : i32
    %c0_i32_1 = arith.constant 0 : i32
    return %c0_i32, %c0_i32_0 : i32, i32
  }
  func.func @transform_6(%arg0: i32, %arg1: i32) -> (i32, i32, i32) {
    %c0_i32 = arith.constant 0 : i32
    %c0_i32_0 = arith.constant 0 : i32
    %c0_i32_1 = arith.constant 0 : i32
    return %arg0, %c0_i32, %c0_i32_0 : i32, i32, i32
  }
  func.func @transform_7(%arg0: i32, %arg1: i32) -> (i32, i32, i32) {
    %c0_i32 = arith.constant 0 : i32
    %c0_i32_0 = arith.constant 0 : i32
    %c0_i32_1 = arith.constant 0 : i32
    return %arg0, %c0_i32, %c0_i32_0 : i32, i32, i32
  }
  func.func @transform_8(%arg0: i32, %arg1: i32) -> (i32, i32) {
    %c0_i32 = arith.constant 0 : i32
    %c0_i32_0 = arith.constant 0 : i32
    %c0_i32_1 = arith.constant 0 : i32
    return %c0_i32, %c0_i32_0 : i32, i32
  }
  func.func @transform_9(%arg0: i32, %arg1: i32) -> (i32, i32) {
    %c0_i32 = arith.constant 0 : i32
    %c0_i32_0 = arith.constant 0 : i32
    %c0_i32_1 = arith.constant 0 : i32
    return %c0_i32, %c0_i32_0 : i32, i32
  }
  func.func @transform_10(%arg0: i32, %arg1: i32) -> (i32, i32, i32, i32) {
    %c0_i32 = arith.constant 0 : i32
    %c0_i32_0 = arith.constant 0 : i32
    %c0_i32_1 = arith.constant 0 : i32
    return %arg0, %arg1, %c0_i32, %c0_i32_0 : i32, i32, i32, i32
  }
  func.func @transform_11(%arg0: i32, %arg1: i32) -> (i32, i32, i32, i32) {
    %c0_i32 = arith.constant 0 : i32
    %c0_i32_0 = arith.constant 0 : i32
    %c0_i32_1 = arith.constant 0 : i32
    return %arg0, %arg1, %c0_i32, %c0_i32_0 : i32, i32, i32, i32
  }
}

module attributes {stable_mosaic.version = 11 : i64} {
  func.func @_table_cls_kernel(%arg0: i32, %arg1: i32, %arg2: memref<1x8x128xf32, #tpu.memory_space<vmem>>, %arg3: memref<1x8x128xf32, #tpu.memory_space<vmem>>, %arg4: memref<128x128xbf16, #tpu.memory_space<vmem>>, %arg5: memref<1x128xf32, #tpu.memory_space<vmem>>, %arg6: memref<128x128xbf16, #tpu.memory_space<vmem>>, %arg7: memref<1x128xf32, #tpu.memory_space<vmem>>, %arg8: memref<8x128xbf16, #tpu.memory_space<vmem>>, %arg9: memref<8x1xf32, #tpu.memory_space<vmem>>, %arg10: memref<1x8x64xf32, #tpu.memory_space<vmem>>) attributes {dimension_semantics = [#tpu.dimension_semantics<parallel>, #tpu.dimension_semantics<parallel>], iteration_bounds = array<i64: 2, 1>, scalar_prefetch = 0 : i64, scratch_operands = 0 : i64, tpu.core_type = #tpu.core_type<tc>, window_params = [{transform_indices = @transform_0, window_bounds = array<i64: 1, 8, 128>}, {transform_indices = @transform_1, window_bounds = array<i64: 1, 8, 128>}, {pipeline_mode = #tpu.pipeline_mode<synchronous>, transform_indices = @transform_2, window_bounds = array<i64: 128, 128>}, {pipeline_mode = #tpu.pipeline_mode<synchronous>, transform_indices = @transform_3, window_bounds = array<i64: 1, 128>}, {pipeline_mode = #tpu.pipeline_mode<synchronous>, transform_indices = @transform_4, window_bounds = array<i64: 128, 128>}, {pipeline_mode = #tpu.pipeline_mode<synchronous>, transform_indices = @transform_5, window_bounds = array<i64: 1, 128>}, {pipeline_mode = #tpu.pipeline_mode<synchronous>, transform_indices = @transform_6, window_bounds = array<i64: 8, 128>}, {pipeline_mode = #tpu.pipeline_mode<synchronous>, transform_indices = @transform_7, window_bounds = array<i64: 8, 1>}, {transform_indices = @transform_8, window_bounds = array<i64: 1, 8, 64>}]} {
    %c0 = arith.constant 0 : index
    %c0_0 = arith.constant 0 : index
    %c0_1 = arith.constant 0 : index
    %0 = vector.load %arg2[%c0, %c0_0, %c0_1] : memref<1x8x128xf32, #tpu.memory_space<vmem>>, vector<1x8x128xf32>
    %1 = vector.shape_cast %0 : vector<1x8x128xf32> to vector<8x128xf32>
    %c0_2 = arith.constant 0 : index
    %c0_3 = arith.constant 0 : index
    %c0_4 = arith.constant 0 : index
    %2 = vector.load %arg3[%c0_2, %c0_3, %c0_4] : memref<1x8x128xf32, #tpu.memory_space<vmem>>, vector<1x8x128xf32>
    %3 = vector.shape_cast %2 : vector<1x8x128xf32> to vector<8x128xf32>
    %4 = vector.shape_cast %1 : vector<8x128xf32> to vector<8x1x128xf32>
    %5 = vector.shape_cast %3 : vector<8x128xf32> to vector<1x8x128xf32>
    %6 = vector.broadcast %4 : vector<8x1x128xf32> to vector<8x8x128xf32>
    %7 = vector.broadcast %5 : vector<1x8x128xf32> to vector<8x8x128xf32>
    %8 = arith.addf %6, %7 : vector<8x8x128xf32>
    %cst = arith.constant 0.000000e+00 : f32
    %9 = vector.broadcast %cst : f32 to vector<8x8x128xf32>
    %10 = arith.maximumf %8, %9 : vector<8x8x128xf32>
    %11 = vector.shape_cast %10 : vector<8x8x128xf32> to vector<64x128xf32>
    %12 = arith.truncf %11 : vector<64x128xf32> to vector<64x128xbf16>
    %c0_5 = arith.constant 0 : index
    %c0_6 = arith.constant 0 : index
    %13 = vector.load %arg4[%c0_5, %c0_6] : memref<128x128xbf16, #tpu.memory_space<vmem>>, vector<128x128xbf16>
    %cst_7 = arith.constant dense<0.000000e+00> : vector<64x128xf32>
    %14 = tpu.matmul %12, %13, %cst_7 {dimension_numbers = #tpu.dot_dimension_numbers<[1], [0], [0], [1], [0, 0, 1, 1], [], []>} : vector<64x128xbf16>, vector<128x128xbf16>, vector<64x128xf32> -> vector<64x128xf32>
    %c0_8 = arith.constant 0 : index
    %c0_9 = arith.constant 0 : index
    %15 = vector.load %arg5[%c0_8, %c0_9] : memref<1x128xf32, #tpu.memory_space<vmem>>, vector<1x128xf32>
    %16 = vector.broadcast %15 : vector<1x128xf32> to vector<64x128xf32>
    %17 = arith.addf %14, %16 : vector<64x128xf32>
    %cst_10 = arith.constant 0.000000e+00 : f32
    %18 = vector.broadcast %cst_10 : f32 to vector<64x128xf32>
    %19 = arith.maximumf %17, %18 : vector<64x128xf32>
    %20 = arith.truncf %19 : vector<64x128xf32> to vector<64x128xbf16>
    %c0_11 = arith.constant 0 : index
    %c0_12 = arith.constant 0 : index
    %21 = vector.load %arg6[%c0_11, %c0_12] : memref<128x128xbf16, #tpu.memory_space<vmem>>, vector<128x128xbf16>
    %cst_13 = arith.constant dense<0.000000e+00> : vector<64x128xf32>
    %22 = tpu.matmul %20, %21, %cst_13 {dimension_numbers = #tpu.dot_dimension_numbers<[1], [0], [0], [1], [0, 0, 1, 1], [], []>} : vector<64x128xbf16>, vector<128x128xbf16>, vector<64x128xf32> -> vector<64x128xf32>
    %c0_14 = arith.constant 0 : index
    %c0_15 = arith.constant 0 : index
    %23 = vector.load %arg7[%c0_14, %c0_15] : memref<1x128xf32, #tpu.memory_space<vmem>>, vector<1x128xf32>
    %24 = vector.broadcast %23 : vector<1x128xf32> to vector<64x128xf32>
    %25 = arith.addf %22, %24 : vector<64x128xf32>
    %cst_16 = arith.constant 0.000000e+00 : f32
    %26 = vector.broadcast %cst_16 : f32 to vector<64x128xf32>
    %27 = arith.maximumf %25, %26 : vector<64x128xf32>
    %c0_17 = arith.constant 0 : index
    %c0_18 = arith.constant 0 : index
    %28 = vector.load %arg8[%c0_17, %c0_18] : memref<8x128xbf16, #tpu.memory_space<vmem>>, vector<8x128xbf16>
    %29 = arith.truncf %27 : vector<64x128xf32> to vector<64x128xbf16>
    %cst_19 = arith.constant dense<0.000000e+00> : vector<8x64xf32>
    %30 = tpu.matmul %28, %29, %cst_19 {dimension_numbers = #tpu.dot_dimension_numbers<[1], [1], [0], [0], [0, 0, 1, 0], [], []>} : vector<8x128xbf16>, vector<64x128xbf16>, vector<8x64xf32> -> vector<8x64xf32>
    %c0_20 = arith.constant 0 : index
    %c0_21 = arith.constant 0 : index
    %31 = vector.load %arg9[%c0_20, %c0_21] : memref<8x1xf32, #tpu.memory_space<vmem>>, vector<8x1xf32>
    %32 = vector.broadcast %31 : vector<8x1xf32> to vector<8x64xf32>
    %33 = arith.addf %30, %32 : vector<8x64xf32>
    %c0_22 = arith.constant 0 : index
    %c0_23 = arith.constant 0 : index
    %c0_24 = arith.constant 0 : index
    %34 = vector.load %arg10[%c0_22, %c0_23, %c0_24] : memref<1x8x64xf32, #tpu.memory_space<vmem>>, vector<1x8x64xf32>
    %35 = vector.shape_cast %34 : vector<1x8x64xf32> to vector<8x64xf32>
    %36 = vector.shape_cast %33 : vector<8x64xf32> to vector<1x8x64xf32>
    tpu.vector_store %arg10[%c0_22, %c0_23, %c0_24], %36 {strides = array<i32>} : memref<1x8x64xf32, #tpu.memory_space<vmem>>, vector<1x8x64xf32>,
    return
  }
  func.func @transform_0(%arg0: i32, %arg1: i32) -> (i32, i32, i32) {
    %c0_i32 = arith.constant 0 : i32
    %c0_i32_0 = arith.constant 0 : i32
    return %arg0, %arg1, %c0_i32 : i32, i32, i32
  }
  func.func @transform_1(%arg0: i32, %arg1: i32) -> (i32, i32, i32) {
    %c0_i32 = arith.constant 0 : i32
    %c0_i32_0 = arith.constant 0 : i32
    %c0_i32_1 = arith.constant 0 : i32
    return %arg0, %c0_i32, %c0_i32_0 : i32, i32, i32
  }
  func.func @transform_2(%arg0: i32, %arg1: i32) -> (i32, i32) {
    %c0_i32 = arith.constant 0 : i32
    %c0_i32_0 = arith.constant 0 : i32
    %c0_i32_1 = arith.constant 0 : i32
    return %c0_i32, %c0_i32_0 : i32, i32
  }
  func.func @transform_3(%arg0: i32, %arg1: i32) -> (i32, i32) {
    %c0_i32 = arith.constant 0 : i32
    %c0_i32_0 = arith.constant 0 : i32
    %c0_i32_1 = arith.constant 0 : i32
    return %c0_i32, %c0_i32_0 : i32, i32
  }
  func.func @transform_4(%arg0: i32, %arg1: i32) -> (i32, i32) {
    %c0_i32 = arith.constant 0 : i32
    %c0_i32_0 = arith.constant 0 : i32
    %c0_i32_1 = arith.constant 0 : i32
    return %c0_i32, %c0_i32_0 : i32, i32
  }
  func.func @transform_5(%arg0: i32, %arg1: i32) -> (i32, i32) {
    %c0_i32 = arith.constant 0 : i32
    %c0_i32_0 = arith.constant 0 : i32
    %c0_i32_1 = arith.constant 0 : i32
    return %c0_i32, %c0_i32_0 : i32, i32
  }
  func.func @transform_6(%arg0: i32, %arg1: i32) -> (i32, i32) {
    %c0_i32 = arith.constant 0 : i32
    %c0_i32_0 = arith.constant 0 : i32
    %c0_i32_1 = arith.constant 0 : i32
    return %c0_i32, %c0_i32_0 : i32, i32
  }
  func.func @transform_7(%arg0: i32, %arg1: i32) -> (i32, i32) {
    %c0_i32 = arith.constant 0 : i32
    %c0_i32_0 = arith.constant 0 : i32
    %c0_i32_1 = arith.constant 0 : i32
    return %c0_i32, %c0_i32_0 : i32, i32
  }
  func.func @transform_8(%arg0: i32, %arg1: i32) -> (i32, i32, i32) {
    %c0_i32 = arith.constant 0 : i32
    %c0_i32_0 = arith.constant 0 : i32
    return %arg0, %c0_i32, %arg1 : i32, i32, i32
  }
}

</mosaic_0001>

<llo_original>
// kernel: hgat_forward.10
$region0: #{hgat_forward.10}
  #allocation0 [shape = 'u32[]', space=smem, size = 0x4, offset = 0x4, fixed_abs, tag = 'smem constant byte address 0x4 - core index']
  #allocation1 [shape = 'u32[144,128]{1,0:T(1,128)}', space=vmem, size = 0x12000, scoped, tag = 'internal scratch']
  %s0 = inlined_call_operand.vmem [shape: f32[16,128], index: 0, kind: input, shape index: {}]
  %s1 = inlined_call_operand.vmem [shape: bf16[128,384], index: 1, kind: input, shape index: {}]
  %s2 = inlined_call_operand.vmem [shape: bf16[16,384], index: 2, kind: output, shape index: {}]
  %s3 = sld [smem:[#allocation0]]
  $region18: #{hgat_forward.10} parent=0
    _
  %s5 = ssub.s32 1, %s3
  %s6 = scalar_select 0, %s5, %s3
  // Predicated region
  $region2: #{hgat_forward.10} parent=0 // pred_check
    _
  $region3: #{hgat_forward.10} parent=0 // pred_check_branch
    %8 = sbr.rel (0) target = $region5
  $region4: #{hgat_forward.10} parent=0 // pred_region
    _
  $region5: #{hgat_forward.10} parent=0 // pred_fallthru
    _
  // Predicated region
  $region6: #{hgat_forward.10} parent=0 // pred_check
    _
  $region7: #{hgat_forward.10} parent=0 // pred_check_branch
    %10 = sbr.rel (0) target = $region9
  $region8: #{hgat_forward.10} parent=0 // pred_region
    _
  $region9: #{hgat_forward.10} parent=0 // pred_fallthru
    _
  %v12 = vld [vmem:[%s0] sm:$0xff]
  %v13 = vld [vmem:[%s0 + $0x8] sm:$0xff]
  %v14 = vpack.c.bf16 %v13, %v12
  %v15 = vld [vmem:[%s1] sm:$0xff]
  %v16 = vld [vmem:[%s1 + $0x8] sm:$0xf]
  %v17 = vld [vmem:[%s1 + $0xc] sm:$0xff]
  %v18 = vld [vmem:[%s1 + $0x14] sm:$0xf]
  %v19 = vld [vmem:[%s1 + $0x18] sm:$0xff]
  %v20 = vld [vmem:[%s1 + $0x20] sm:$0xf]
  %v21 = vld [vmem:[%s1 + $0x24] sm:$0xff]
  %v22 = vld [vmem:[%s1 + $0x2c] sm:$0xf]
  %v23 = vld [vmem:[%s1 + $0x30] sm:$0xff]
  %v24 = vld [vmem:[%s1 + $0x38] sm:$0xf]
  %v25 = vld [vmem:[%s1 + $0x3c] sm:$0xff]
  %v26 = vld [vmem:[%s1 + $0x44] sm:$0xf]
  %v27 = vld [vmem:[%s1 + $0x48] sm:$0xff]
  %v28 = vld [vmem:[%s1 + $0x50] sm:$0xf]
  %v29 = vld [vmem:[%s1 + $0x54] sm:$0xff]
  %v30 = vld [vmem:[%s1 + $0x5c] sm:$0xf]
  %v31 = vld [vmem:[%s1 + $0x60] sm:$0xff]
  %v32 = vld [vmem:[%s1 + $0x68] sm:$0xf]
  %v33 = vld [vmem:[%s1 + $0x6c] sm:$0xff]
  %v34 = vld [vmem:[%s1 + $0x74] sm:$0xf]
  %v35 = vld [vmem:[%s1 + $0x78] sm:$0xff]
  %v36 = vld [vmem:[%s1 + $0x80] sm:$0xf]
  %v37 = vld [vmem:[%s1 + $0x84] sm:$0xff]
  %v38 = vld [vmem:[%s1 + $0x8c] sm:$0xf]
  %v39 = vld [vmem:[%s1 + $0x90] sm:$0xff]
  %v40 = vld [vmem:[%s1 + $0x98] sm:$0xf]
  %v41 = vld [vmem:[%s1 + $0x9c] sm:$0xff]
  %v42 = vld [vmem:[%s1 + $0xa4] sm:$0xf]
  %v43 = vld [vmem:[%s1 + $0xa8] sm:$0xff]
  %v44 = vld [vmem:[%s1 + $0xb0] sm:$0xf]
  %v45 = vld [vmem:[%s1 + $0xb4] sm:$0xff]
  %v46 = vld [vmem:[%s1 + $0xbc] sm:$0xf]
  %v79 = vunpack.c.l.b16 %v15
  %v80 = vunpack.c.h.b16 %v15
  %v81 = vunpack.c.l.b16 %v16
  %v82 = vunpack.c.l.b16 %v17
  %v83 = vunpack.c.h.b16 %v17
  %v84 = vunpack.c.l.b16 %v18
  %v85 = vunpack.c.l.b16 %v19
  %v86 = vunpack.c.h.b16 %v19
  %v87 = vunpack.c.l.b16 %v20
  %v88 = vunpack.c.l.b16 %v21
  %v89 = vunpack.c.h.b16 %v21
  %v90 = vunpack.c.l.b16 %v22
  %v91 = vunpack.c.l.b16 %v23
  %v92 = vunpack.c.h.b16 %v23
  %v93 = vunpack.c.l.b16 %v24
  %v94 = vunpack.c.l.b16 %v25
  %v95 = vunpack.c.h.b16 %v25
  %v96 = vunpack.c.l.b16 %v26
  %v97 = vunpack.c.l.b16 %v27
  %v98 = vunpack.c.h.b16 %v27
  %v99 = vunpack.c.l.b16 %v28
  %v100 = vunpack.c.l.b16 %v29
  %v101 = vunpack.c.h.b16 %v29
  %v102 = vunpack.c.l.b16 %v30
  %v103 = vunpack.c.l.b16 %v31
  %v104 = vunpack.c.h.b16 %v31
  %v105 = vunpack.c.l.b16 %v32
  %v106 = vunpack.c.l.b16 %v33
  %v107 = vunpack.c.h.b16 %v33
  %v108 = vunpack.c.l.b16 %v34
  %v109 = vunpack.c.l.b16 %v35
  %v110 = vunpack.c.h.b16 %v35
  %v111 = vunpack.c.l.b16 %v36
  %v112 = vunpack.c.l.b16 %v37
  %v113 = vunpack.c.h.b16 %v37
  %v114 = vunpack.c.l.b16 %v38
  %v115 = vunpack.c.l.b16 %v39
  %v116 = vunpack.c.h.b16 %v39
  %v117 = vunpack.c.l.b16 %v40
  %v118 = vunpack.c.l.b16 %v41
  %v119 = vunpack.c.h.b16 %v41
  %v120 = vunpack.c.l.b16 %v42
  %v121 = vunpack.c.l.b16 %v43
  %v122 = vunpack.c.h.b16 %v43
  %v123 = vunpack.c.l.b16 %v44
  %v124 = vunpack.c.l.b16 %v45
  %v125 = vunpack.c.h.b16 %v45
  %v126 = vunpack.c.l.b16 %v46
  %v127 = vpack.c.b16 %v82, %v79
  %v128 = vpack.c.b16 %v83, %v80
  %v129 = vpack.c.b16 %v84, %v81
  %v130 = vpack.c.b16 %v88, %v85
  %v131 = vpack.c.b16 %v89, %v86
  %v132 = vpack.c.b16 %v90, %v87
  %v133 = vpack.c.b16 %v94, %v91
  %v134 = vpack.c.b16 %v95, %v92
  %v135 = vpack.c.b16 %v96, %v93
  %v136 = vpack.c.b16 %v100, %v97
  %v137 = vpack.c.b16 %v101, %v98
  %v138 = vpack.c.b16 %v102, %v99
  %v139 = vpack.c.b16 %v106, %v103
  %v140 = vpack.c.b16 %v107, %v104
  %v141 = vpack.c.b16 %v108, %v105
  %v142 = vpack.c.b16 %v112, %v109
  %v143 = vpack.c.b16 %v113, %v110
  %v144 = vpack.c.b16 %v114, %v111
  %v145 = vpack.c.b16 %v118, %v115
  %v146 = vpack.c.b16 %v119, %v116
  %v147 = vpack.c.b16 %v120, %v117
  %v148 = vpack.c.b16 %v124, %v121
  %v149 = vpack.c.b16 %v125, %v122
  %v150 = vpack.c.b16 %v126, %v123
  %175 = vmatprep.subr.bf16.mxu0 %v128
  %176 = vmatpush1.bf16.msra.mxu0 %v127
  %177 = vmatprep.subr.bf16.mxu0 %v131
  %178 = vmatpush1.bf16.msra.mxu0 %v130
  %179 = vmatprep.subr.bf16.mxu0 %v134
  %180 = vmatpush1.bf16.msra.mxu0 %v133
  %181 = vmatprep.subr.bf16.mxu0 %v137
  %182 = vmatpush1.bf16.msra.mxu0 %v136
  %183 = vmatprep.subr.bf16.mxu0 %v140
  %184 = vmatpush1.bf16.msra.mxu0 %v139
  %185 = vmatprep.subr.bf16.mxu0 %v143
  %186 = vmatpush1.bf16.msra.mxu0 %v142
  %187 = vmatprep.subr.bf16.mxu0 %v146
  %188 = vmatpush1.bf16.msra.mxu0 %v145
  %189 = vmatprep.subr.bf16.mxu0 %v149
  %190 = vmatpush1.bf16.msra.mxu0 %v148
  %191 = vmatprep.subr.bf16.mxu0 0
  %192 = vmatpush1.bf16.msra.mxu0 0
  %193 = vmatprep.subr.bf16.mxu0 0
  %194 = vmatpush1.bf16.msra.mxu0 0
  %195 = vmatprep.subr.bf16.mxu0 0
  %196 = vmatpush1.bf16.msra.mxu0 0
  %197 = vmatprep.subr.bf16.mxu0 0
  %198 = vmatpush1.bf16.msra.mxu0 0
  %199 = vmatprep.subr.bf16.mxu0 0
  %200 = vmatpush1.bf16.msra.mxu0 0
  %201 = vmatprep.subr.bf16.mxu0 0
  %202 = vmatpush1.bf16.msra.mxu0 0
  %203 = vmatprep.subr.bf16.mxu0 0
  %204 = vmatpush1.bf16.msra.mxu0 0
  %205 = vmatprep.subr.bf16.mxu0 0
  %206 = vmatpush1.bf16.msra.mxu0 0
  %207 = vmatprep.mubr.bf16.mxu0 0
  %208 = vmatmul.mubr.bf16.gmra.mrb[0].mxu0 %v14
  %v209 = vpop.f32.mrb[0].mxu0
  %v210 = vadd.f32 0.0, %v209
  %v211 = vpop.f32.mrb[0].mxu0
  %v212 = vadd.f32 0.0, %v211
  %v213 = vpop.f32.mrb[0].mxu0
  %v214 = vadd.f32 0.0, %v213
  %v215 = vpop.f32.mrb[0].mxu0
  %v216 = vadd.f32 0.0, %v215
  %217 = vdwg.mxu0
  %218 = vmatprep.subr.bf16.mxu0 0
  %219 = vmatpush1.bf16.msra.mxu0 %v129
  %220 = vmatprep.subr.bf16.mxu0 0
  %221 = vmatpush1.bf16.msra.mxu0 %v132
  %222 = vmatprep.subr.bf16.mxu0 0
  %223 = vmatpush1.bf16.msra.mxu0 %v135
  %224 = vmatprep.subr.bf16.mxu0 0
  %225 = vmatpush1.bf16.msra.mxu0 %v138
  %226 = vmatprep.subr.bf16.mxu0 0
  %227 = vmatpush1.bf16.msra.mxu0 %v141
  %228 = vmatprep.subr.bf16.mxu0 0
  %229 = vmatpush1.bf16.msra.mxu0 %v144
  %230 = vmatprep.subr.bf16.mxu0 0
  %231 = vmatpush1.bf16.msra.mxu0 %v147
  %232 = vmatprep.subr.bf16.mxu0 0
  %233 = vmatpush1.bf16.msra.mxu0 %v150
  %234 = vmatprep.subr.bf16.mxu0 0
  %235 = vmatpush1.bf16.msra.mxu0 0
  %236 = vmatprep.subr.bf16.mxu0 0
  %237 = vmatpush1.bf16.msra.mxu0 0
  %238 = vmatprep.subr.bf16.mxu0 0
  %239 = vmatpush1.bf16.msra.mxu0 0
  %240 = vmatprep.subr.bf16.mxu0 0
  %241 = vmatpush1.bf16.msra.mxu0 0
  %242 = vmatprep.subr.bf16.mxu0 0
  %243 = vmatpush1.bf16.msra.mxu0 0
  %244 = vmatprep.subr.bf16.mxu0 0
  %245 = vmatpush1.bf16.msra.mxu0 0
  %246 = vmatprep.subr.bf16.mxu0 0
  %247 = vmatpush1.bf16.msra.mxu0 0
  %248 = vmatprep.subr.bf16.mxu0 0
  %249 = vmatpush1.bf16.msra.mxu0 0
  %250 = vmatprep.mubr.bf16.mxu0 0
  %251 = vmatmul.mubr.bf16.gmra.mrb[0].mxu0 %v14
  %v252 = vpop.f32.mrb[0].mxu0
  %v253 = vadd.f32 0.0, %v252
  %v254 = vpop.f32.mrb[0].mxu0
  %v255 = vpop.f32.mrb[0].mxu0
  %v256 = vadd.f32 0.0, %v255
  %v257 = vpop.f32.mrb[0].mxu0
  %258 = vdwg.mxu0
  %v259 = vpack.c.bf16 %v214, %v210
  %v260 = vpack.c.bf16 %v216, %v212
  %v261 = vpack.c.bf16 %v256, %v253
  %v265 = vunpack.c.l.b16 %v259
  %v266 = vunpack.c.l.b16 %v260
  %v267 = vunpack.c.l.b16 %v261
  %v268 = vunpack.c.h.b16 %v259
  %v269 = vunpack.c.h.b16 %v260
  %v270 = vunpack.c.h.b16 %v261
  %v271 = vpack.c.b16 %v266, %v265
  %v272 = vpack.c.b16 %v267, %v267
  %v273 = vpack.c.b16 %v269, %v268
  %v274 = vpack.c.b16 %v270, %v270
  %279 = vst [vmem:[%s2] sm:$0xff] %v271
  %280 = vst [vmem:[%s2 + $0x8] sm:$0xf] %v272
  %281 = vst [vmem:[%s2 + $0xc] sm:$0xff] %v273
  %282 = vst [vmem:[%s2 + $0x14] sm:$0xf] %v274
  // Predicated region
  $region10: #{hgat_forward.10} parent=0 // pred_check
    _
  $region11: #{hgat_forward.10} parent=0 // pred_check_branch
    %284 = sbr.rel (0) target = $region13
  $region12: #{hgat_forward.10} parent=0 // pred_region
    _
  $region13: #{hgat_forward.10} parent=0 // pred_fallthru
    _
  // Predicated region
  $region14: #{hgat_forward.10} parent=0 // pred_check
    _
  $region15: #{hgat_forward.10} parent=0 // pred_check_branch
    %286 = sbr.rel (0) target = $region17
  $region16: #{hgat_forward.10} parent=0 // pred_region
    _
  $region17: #{hgat_forward.10} parent=0 // pred_fallthru
    _

// kernel: hgat_forward.12
$region0: #{hgat_forward.12}
  #allocation0 [shape = 'u32[]', space=smem, size = 0x4, offset = 0x4, fixed_abs, tag = 'smem constant byte address 0x4 - core index']
  #allocation1 [shape = 'u32[144,128]{1,0:T(1,128)}', space=vmem, size = 0x12000, scoped, tag = 'internal scratch']
  %s0 = inlined_call_operand.vmem [shape: bf16[16,16], index: 0, kind: input, shape index: {}]
  %s1 = inlined_call_operand.vmem [shape: bf16[16,16], index: 1, kind: input, shape index: {}]
  %s2 = inlined_call_operand.vmem [shape: bf16[16,384], index: 2, kind: input, shape index: {}, may-alias: {2,4}]
  %s3 = inlined_call_operand.vmem [shape: bf16[16,384], index: 3, kind: input, shape index: {}]
  %s4 = inlined_call_operand.vmem [shape: bf16[16,384], index: 4, kind: input, shape index: {}, may-alias: {2,4}]
  %s5 = inlined_call_operand.vmem [shape: f32[1,128], index: 5, kind: input, shape index: {}]
  %s6 = inlined_call_operand.vmem [shape: f32[16,128], index: 6, kind: output, shape index: {}]
  %s7 = sld [smem:[#allocation0]]
  $region157: #{hgat_forward.12} parent=0
    _
  %s9 = ssub.s32 1, %s7
  %s10 = scalar_select 0, %s9, %s7
  $region1: #{hgat_forward.12} parent=0
    #allocation2 [shape = 'u8[4096]{0}', space=vmem, size = 0x1000, scoped, tag = 'input window, operand 2, single buffered']
    #allocation3 [shape = 'u8[4096]{0}', space=vmem, size = 0x1000, scoped, tag = 'input window, operand 3, single buffered']
    #allocation4 [shape = 'u8[4096]{0}', space=vmem, size = 0x1000, scoped, tag = 'input window, operand 4, single buffered']
    // Predicated region
    $region2: #{hgat_forward.12} parent=1 // pred_check
      _
    $region3: #{hgat_forward.12} parent=1 // pred_check_branch
      %12 = sbr.rel (0) target = $region5
    $region4: #{hgat_forward.12} parent=1 // pred_region
      _
    $region5: #{hgat_forward.12} parent=1 // pred_fallthru
      _
    // Predicated region
    $region6: #{hgat_forward.12} parent=1 // pred_check
      _
    $region7: #{hgat_forward.12} parent=1 // pred_check_branch
      %14 = sbr.rel (0) target = $region9
    $region8: #{hgat_forward.12} parent=1 // pred_region
      _
    $region9: #{hgat_forward.12} parent=1 // pred_fallthru
      _
    // Predicated region
    $region10: #{hgat_forward.12} parent=1 // pred_check
      _
    $region11: #{hgat_forward.12} parent=1 // pred_check_branch
      %16 = sbr.rel (0) target = $region13
    $region12: #{hgat_forward.12} parent=1 // pred_region
      // Predicated region
      $region14: #{hgat_forward.12} parent=12 // pred_check
        _
      $region15: #{hgat_forward.12} parent=12 // pred_check_branch
        %18 = sbr.rel (0) target = $region17
      $region16: #{hgat_forward.12} parent=12 // pred_region
        // Predicated region
        $region18: #{hgat_forward.12} parent=16 // pred_check
          _
        $region19: #{hgat_forward.12} parent=16 // pred_check_branch
          %20 = sbr.rel target = $region21
        $region20: #{hgat_forward.12} parent=16 // pred_region
          // Predicated region
          $region33: #{hgat_forward.12} parent=20 // pred_check
            _
          $region34: #{hgat_forward.12} parent=20 // pred_check_branch
            %37 = sbr.rel (0) target = $region36
          $region35: #{hgat_forward.12} parent=20 // pred_region
            loop: start=0, step=1, limit=1
            $region37: #{hgat_forward.12} parent=35 // loop_pre_header
              _
            $region38: #{hgat_forward.12} parent=35 // loop_header
              %s39 = sphi 0, %s43
              %p40 = scmp.ge.s32.totalorder %s39, 1
              %s44 = sphi %s2, %s2
              %s45 = sphi [#allocation2], [#allocation2]
            $region39: #{hgat_forward.12} parent=35 // loop_header_branch
              %42 = sbr.rel (%p40) target = $region43
            $region40: #{hgat_forward.12} parent=35 // loop_body
              _
            $region41: #{hgat_forward.12} parent=35 // loop_footer
              %s43 = sadd.s32 1, %s39
            $region42: #{hgat_forward.12} parent=35 // loop_footer_branch
              %38 = sbr.rel target = $region38
            $region43: #{hgat_forward.12} parent=35 // loop_exit
              _
            loop: start=0, step=1, limit=1
            $region44: #{hgat_forward.12} parent=35 // loop_pre_header
              _
            $region45: #{hgat_forward.12} parent=35 // loop_header
              %s48 = sphi 0, %s52
              %p49 = scmp.ge.s32.totalorder %s48, 1
              %s53 = sphi %s2, %s2
              %s54 = sphi [#allocation2], [#allocation2]
            $region46: #{hgat_forward.12} parent=35 // loop_header_branch
              %51 = sbr.rel (%p49) target = $region50
            $region47: #{hgat_forward.12} parent=35 // loop_body
              %v55 = vld [vmem:[%s53] sm:$0xf]
              %56 = vst [vmem:[%s54] sm:$0xf] %v55
              %v57 = vld [vmem:[%s53 + $0xc] sm:$0xf]
              %58 = vst [vmem:[%s54 + $0x4] sm:$0xf] %v57
            $region48: #{hgat_forward.12} parent=35 // loop_footer
              %s52 = sadd.s32 1, %s48
            $region49: #{hgat_forward.12} parent=35 // loop_footer_branch
              %47 = sbr.rel target = $region45
            $region50: #{hgat_forward.12} parent=35 // loop_exit
              _
          $region36: #{hgat_forward.12} parent=20 // pred_fallthru
            _
        $region21: #{hgat_forward.12} parent=16 // pred_fallthru
          _
        // Predicated region
        $region22: #{hgat_forward.12} parent=16 // pred_check
          _
        $region23: #{hgat_forward.12} parent=16 // pred_check_branch
          %22 = sbr.rel (0) target = $region25
        $region24: #{hgat_forward.12} parent=16 // pred_region
          loop: start=0, step=1, limit=1
          $region26: #{hgat_forward.12} parent=24 // loop_pre_header
            _
          $region27: #{hgat_forward.12} parent=24 // loop_header
            %s25 = sphi 0, %s29
            %p26 = scmp.ge.s32.totalorder %s25, 1
            %s30 = sphi %s2, %s2
            %s31 = sphi [#allocation2], [#allocation2]
          $region28: #{hgat_forward.12} parent=24 // loop_header_branch
            %28 = sbr.rel (%p26) target = $region32
          $region29: #{hgat_forward.12} parent=24 // loop_body
            %v32 = vld [vmem:[%s30] sm:$0xf]
            %33 = vst [vmem:[%s31] sm:$0xf] %v32
            %v34 = vld [vmem:[%s30 + $0xc] sm:$0xf]
            %35 = vst [vmem:[%s31 + $0x4] sm:$0xf] %v34
          $region30: #{hgat_forward.12} parent=24 // loop_footer
            %s29 = sadd.s32 1, %s25
          $region31: #{hgat_forward.12} parent=24 // loop_footer_branch
            %24 = sbr.rel target = $region27
          $region32: #{hgat_forward.12} parent=24 // loop_exit
            _
        $region25: #{hgat_forward.12} parent=16 // pred_fallthru
          _
      $region17: #{hgat_forward.12} parent=12 // pred_fallthru
        _
      %59 = vnop
    $region13: #{hgat_forward.12} parent=1 // pred_fallthru
      _
    // Predicated region
    $region51: #{hgat_forward.12} parent=1 // pred_check
      _
    $region52: #{hgat_forward.12} parent=1 // pred_check_branch
      %61 = sbr.rel (0) target = $region54
    $region53: #{hgat_forward.12} parent=1 // pred_region
      %s62 = scalar_lea.vmem %s3, 4
      // Predicated region
      $region55: #{hgat_forward.12} parent=53 // pred_check
        _
      $region56: #{hgat_forward.12} parent=53 // pred_check_branch
        %64 = sbr.rel (0) target = $region58
      $region57: #{hgat_forward.12} parent=53 // pred_region
        // Predicated region
        $region59: #{hgat_forward.12} parent=57 // pred_check
          _
        $region60: #{hgat_forward.12} parent=57 // pred_check_branch
          %66 = sbr.rel target = $region62
        $region61: #{hgat_forward.12} parent=57 // pred_region
          // Predicated region
          $region74: #{hgat_forward.12} parent=61 // pred_check
            _
          $region75: #{hgat_forward.12} parent=61 // pred_check_branch
            %83 = sbr.rel (0) target = $region77
          $region76: #{hgat_forward.12} parent=61 // pred_region
            loop: start=0, step=1, limit=1
            $region78: #{hgat_forward.12} parent=76 // loop_pre_header
              _
            $region79: #{hgat_forward.12} parent=76 // loop_header
              %s85 = sphi 0, %s89
              %p86 = scmp.ge.s32.totalorder %s85, 1
              %s90 = sphi %s62, %s62
              %s91 = sphi [#allocation3], [#allocation3]
            $region80: #{hgat_forward.12} parent=76 // loop_header_branch
              %88 = sbr.rel (%p86) target = $region84
            $region81: #{hgat_forward.12} parent=76 // loop_body
              _
            $region82: #{hgat_forward.12} parent=76 // loop_footer
              %s89 = sadd.s32 1, %s85
            $region83: #{hgat_forward.12} parent=76 // loop_footer_branch
              %84 = sbr.rel target = $region79
            $region84: #{hgat_forward.12} parent=76 // loop_exit
              _
            loop: start=0, step=1, limit=1
            $region85: #{hgat_forward.12} parent=76 // loop_pre_header
              _
            $region86: #{hgat_forward.12} parent=76 // loop_header
              %s94 = sphi 0, %s98
              %p95 = scmp.ge.s32.totalorder %s94, 1
              %s99 = sphi %s62, %s62
              %s100 = sphi [#allocation3], [#allocation3]
            $region87: #{hgat_forward.12} parent=76 // loop_header_branch
              %97 = sbr.rel (%p95) target = $region91
            $region88: #{hgat_forward.12} parent=76 // loop_body
              %v101 = vld [vmem:[%s99] sm:$0xf]
              %102 = vst [vmem:[%s100] sm:$0xf] %v101
              %v103 = vld [vmem:[%s99 + $0xc] sm:$0xf]
              %104 = vst [vmem:[%s100 + $0x4] sm:$0xf] %v103
            $region89: #{hgat_forward.12} parent=76 // loop_footer
              %s98 = sadd.s32 1, %s94
            $region90: #{hgat_forward.12} parent=76 // loop_footer_branch
              %93 = sbr.rel target = $region86
            $region91: #{hgat_forward.12} parent=76 // loop_exit
              _
          $region77: #{hgat_forward.12} parent=61 // pred_fallthru
            _
        $region62: #{hgat_forward.12} parent=57 // pred_fallthru
          _
        // Predicated region
        $region63: #{hgat_forward.12} parent=57 // pred_check
          _
        $region64: #{hgat_forward.12} parent=57 // pred_check_branch
          %68 = sbr.rel (0) target = $region66
        $region65: #{hgat_forward.12} parent=57 // pred_region
          loop: start=0, step=1, limit=1
          $region67: #{hgat_forward.12} parent=65 // loop_pre_header
            _
          $region68: #{hgat_forward.12} parent=65 // loop_header
            %s71 = sphi 0, %s75
            %p72 = scmp.ge.s32.totalorder %s71, 1
            %s76 = sphi %s62, %s62
            %s77 = sphi [#allocation3], [#allocation3]
          $region69: #{hgat_forward.12} parent=65 // loop_header_branch
            %74 = sbr.rel (%p72) target = $region73
          $region70: #{hgat_forward.12} parent=65 // loop_body
            %v78 = vld [vmem:[%s76] sm:$0xf]
            %79 = vst [vmem:[%s77] sm:$0xf] %v78
            %v80 = vld [vmem:[%s76 + $0xc] sm:$0xf]
            %81 = vst [vmem:[%s77 + $0x4] sm:$0xf] %v80
          $region71: #{hgat_forward.12} parent=65 // loop_footer
            %s75 = sadd.s32 1, %s71
          $region72: #{hgat_forward.12} parent=65 // loop_footer_branch
            %70 = sbr.rel target = $region68
          $region73: #{hgat_forward.12} parent=65 // loop_exit
            _
        $region66: #{hgat_forward.12} parent=57 // pred_fallthru
          _
      $region58: #{hgat_forward.12} parent=53 // pred_fallthru
        _
      %105 = vnop
    $region54: #{hgat_forward.12} parent=1 // pred_fallthru
      _
    // Predicated region
    $region92: #{hgat_forward.12} parent=1 // pred_check
      _
    $region93: #{hgat_forward.12} parent=1 // pred_check_branch
      %107 = sbr.rel (0) target = $region95
    $region94: #{hgat_forward.12} parent=1 // pred_region
      %s108 = scalar_lea.vmem %s4, 8
      // Predicated region
      $region96: #{hgat_forward.12} parent=94 // pred_check
        _
      $region97: #{hgat_forward.12} parent=94 // pred_check_branch
        %110 = sbr.rel (0) target = $region99
      $region98: #{hgat_forward.12} parent=94 // pred_region
        // Predicated region
        $region100: #{hgat_forward.12} parent=98 // pred_check
          _
        $region101: #{hgat_forward.12} parent=98 // pred_check_branch
          %112 = sbr.rel target = $region103
        $region102: #{hgat_forward.12} parent=98 // pred_region
          // Predicated region
          $region115: #{hgat_forward.12} parent=102 // pred_check
            _
          $region116: #{hgat_forward.12} parent=102 // pred_check_branch
            %129 = sbr.rel (0) target = $region118
          $region117: #{hgat_forward.12} parent=102 // pred_region
            loop: start=0, step=1, limit=1
            $region119: #{hgat_forward.12} parent=117 // loop_pre_header
              _
            $region120: #{hgat_forward.12} parent=117 // loop_header
              %s131 = sphi 0, %s135
              %p132 = scmp.ge.s32.totalorder %s131, 1
              %s136 = sphi %s108, %s108
              %s137 = sphi [#allocation4], [#allocation4]
            $region121: #{hgat_forward.12} parent=117 // loop_header_branch
              %134 = sbr.rel (%p132) target = $region125
            $region122: #{hgat_forward.12} parent=117 // loop_body
              _
            $region123: #{hgat_forward.12} parent=117 // loop_footer
              %s135 = sadd.s32 1, %s131
            $region124: #{hgat_forward.12} parent=117 // loop_footer_branch
              %130 = sbr.rel target = $region120
            $region125: #{hgat_forward.12} parent=117 // loop_exit
              _
            loop: start=0, step=1, limit=1
            $region126: #{hgat_forward.12} parent=117 // loop_pre_header
              _
            $region127: #{hgat_forward.12} parent=117 // loop_header
              %s140 = sphi 0, %s144
              %p141 = scmp.ge.s32.totalorder %s140, 1
              %s145 = sphi %s108, %s108
              %s146 = sphi [#allocation4], [#allocation4]
            $region128: #{hgat_forward.12} parent=117 // loop_header_branch
              %143 = sbr.rel (%p141) target = $region132
            $region129: #{hgat_forward.12} parent=117 // loop_body
              %v147 = vld [vmem:[%s145] sm:$0xf]
              %148 = vst [vmem:[%s146] sm:$0xf] %v147
              %v149 = vld [vmem:[%s145 + $0xc] sm:$0xf]
              %150 = vst [vmem:[%s146 + $0x4] sm:$0xf] %v149
            $region130: #{hgat_forward.12} parent=117 // loop_footer
              %s144 = sadd.s32 1, %s140
            $region131: #{hgat_forward.12} parent=117 // loop_footer_branch
              %139 = sbr.rel target = $region127
            $region132: #{hgat_forward.12} parent=117 // loop_exit
              _
          $region118: #{hgat_forward.12} parent=102 // pred_fallthru
            _
        $region103: #{hgat_forward.12} parent=98 // pred_fallthru
          _
        // Predicated region
        $region104: #{hgat_forward.12} parent=98 // pred_check
          _
        $region105: #{hgat_forward.12} parent=98 // pred_check_branch
          %114 = sbr.rel (0) target = $region107
        $region106: #{hgat_forward.12} parent=98 // pred_region
          loop: start=0, step=1, limit=1
          $region108: #{hgat_forward.12} parent=106 // loop_pre_header
            _
          $region109: #{hgat_forward.12} parent=106 // loop_header
            %s117 = sphi 0, %s121
            %p118 = scmp.ge.s32.totalorder %s117, 1
            %s122 = sphi %s108, %s108
            %s123 = sphi [#allocation4], [#allocation4]
          $region110: #{hgat_forward.12} parent=106 // loop_header_branch
            %120 = sbr.rel (%p118) target = $region114
          $region111: #{hgat_forward.12} parent=106 // loop_body
            %v124 = vld [vmem:[%s122] sm:$0xf]
            %125 = vst [vmem:[%s123] sm:$0xf] %v124
            %v126 = vld [vmem:[%s122 + $0xc] sm:$0xf]
            %127 = vst [vmem:[%s123 + $0x4] sm:$0xf] %v126
          $region112: #{hgat_forward.12} parent=106 // loop_footer
            %s121 = sadd.s32 1, %s117
          $region113: #{hgat_forward.12} parent=106 // loop_footer_branch
            %116 = sbr.rel target = $region109
          $region114: #{hgat_forward.12} parent=106 // loop_exit
            _
        $region107: #{hgat_forward.12} parent=98 // pred_fallthru
          _
      $region99: #{hgat_forward.12} parent=94 // pred_fallthru
        _
      %151 = vnop
    $region95: #{hgat_forward.12} parent=1 // pred_fallthru
      _
    // Predicated region
    $region133: #{hgat_forward.12} parent=1 // pred_check
      _
    $region134: #{hgat_forward.12} parent=1 // pred_check_branch
      %153 = sbr.rel (0) target = $region136
    $region135: #{hgat_forward.12} parent=1 // pred_region
      _
    $region136: #{hgat_forward.12} parent=1 // pred_fallthru
      _
    // Predicated region
    $region137: #{hgat_forward.12} parent=1 // pred_check
      _
    $region138: #{hgat_forward.12} parent=1 // pred_check_branch
      %155 = sbr.rel (0) target = $region140
    $region139: #{hgat_forward.12} parent=1 // pred_region
      _
    $region140: #{hgat_forward.12} parent=1 // pred_fallthru
      _
    // Predicated region
    $region141: #{hgat_forward.12} parent=1 // pred_check
      _
    $region142: #{hgat_forward.12} parent=1 // pred_check_branch
      %157 = sbr.rel (0) target = $region144
    $region143: #{hgat_forward.12} parent=1 // pred_region
      _
    $region144: #{hgat_forward.12} parent=1 // pred_fallthru
      _
    // Predicated region
    $region145: #{hgat_forward.12} parent=1 // pred_check
      _
    $region146: #{hgat_forward.12} parent=1 // pred_check_branch
      %159 = sbr.rel (0) target = $region148
    $region147: #{hgat_forward.12} parent=1 // pred_region
      _
    $region148: #{hgat_forward.12} parent=1 // pred_fallthru
      _
    %v161 = vld [vmem:[%s0] sm:$0xf]
    %v162 = vld [vmem:[%s0 + $0x4] sm:$0xf]
    %v163 = vld [vmem:[#allocation2] sm:$0xf]
    %v164 = vld [vmem:[#allocation2 + $0x4] sm:$0xf]
    %v165 = vld [vmem:[%s1] sm:$0xf]
    %v166 = vld [vmem:[%s1 + $0x4] sm:$0xf]
    %v167 = vld [vmem:[#allocation3] sm:$0xf]
    %v168 = vld [vmem:[#allocation3 + $0x4] sm:$0xf]
    %v171 = vunpack.c.l.b16 %v165
    %v172 = vunpack.c.l.b16 %v166
    %v173 = vpack.c.b16 %v172, %v171
    %v176 = vunpack.c.l.b16 %v167
    %v177 = vunpack.c.l.b16 %v168
    %v178 = vpack.c.b16 %v177, %v176
    %vm180 = vcmask 130048
    %v182 = vsel %vm180, %v173, 0
    %184 = vmatprep.subr.bf16.mxu0 0
    %185 = vmatpush1.bf16.msra.mxu0 %v178
    %186 = vmatprep.subr.bf16.mxu0 0
    %187 = vmatpush1.bf16.msra.mxu0 0
    %188 = vmatprep.subr.bf16.mxu0 0
    %189 = vmatpush1.bf16.msra.mxu0 0
    %190 = vmatprep.subr.bf16.mxu0 0
    %191 = vmatpush1.bf16.msra.mxu0 0
    %192 = vmatprep.subr.bf16.mxu0 0
    %193 = vmatpush1.bf16.msra.mxu0 0
    %194 = vmatprep.subr.bf16.mxu0 0
    %195 = vmatpush1.bf16.msra.mxu0 0
    %196 = vmatprep.subr.bf16.mxu0 0
    %197 = vmatpush1.bf16.msra.mxu0 0
    %198 = vmatprep.subr.bf16.mxu0 0
    %199 = vmatpush1.bf16.msra.mxu0 0
    %200 = vmatprep.subr.bf16.mxu0 0
    %201 = vmatpush1.bf16.msra.mxu0 0
    %202 = vmatprep.subr.bf16.mxu0 0
    %203 = vmatpush1.bf16.msra.mxu0 0
    %204 = vmatprep.subr.bf16.mxu0 0
    %205 = vmatpush1.bf16.msra.mxu0 0
    %206 = vmatprep.subr.bf16.mxu0 0
    %207 = vmatpush1.bf16.msra.mxu0 0
    %208 = vmatprep.subr.bf16.mxu0 0
    %209 = vmatpush1.bf16.msra.mxu0 0
    %210 = vmatprep.subr.bf16.mxu0 0
    %211 = vmatpush1.bf16.msra.mxu0 0
    %212 = vmatprep.subr.bf16.mxu0 0
    %213 = vmatpush1.bf16.msra.mxu0 0
    %214 = vmatprep.subr.bf16.mxu0 0
    %215 = vmatpush1.bf16.msra.mxu0 0
    %216 = vmatprep.mubr.bf16.mxu0 0
    %217 = vmatmul.mubr.bf16.gmra.mrb[0].mxu0 %v182
    %v218 = vpop.f32.mrb[0].mxu0
    %v219 = vadd.f32 0.0, %v218
    %v220 = vpop.f32.mrb[0].mxu0
    %v221 = vpop.f32.mrb[0].mxu0
    %v222 = vadd.f32 0.0, %v221
    %v223 = vpop.f32.mrb[0].mxu0
    %224 = vdwg.mxu0
    %v227 = vunpack.c.l.b16 %v161
    %v228 = vunpack.c.l.b16 %v162
    %v229 = vpack.c.b16 %v228, %v227
    %v232 = vunpack.c.l.b16 %v163
    %v233 = vunpack.c.l.b16 %v164
    %v234 = vpack.c.b16 %v233, %v232
    %v237 = vsel %vm180, %v229, 0
    %239 = vmatprep.subr.bf16.mxu0 0
    %240 = vmatpush1.bf16.msra.mxu0 %v234
    %241 = vmatprep.subr.bf16.mxu0 0
    %242 = vmatpush1.bf16.msra.mxu0 0
    %243 = vmatprep.subr.bf16.mxu0 0
    %244 = vmatpush1.bf16.msra.mxu0 0
    %245 = vmatprep.subr.bf16.mxu0 0
    %246 = vmatpush1.bf16.msra.mxu0 0
    %247 = vmatprep.subr.bf16.mxu0 0
    %248 = vmatpush1.bf16.msra.mxu0 0
    %249 = vmatprep.subr.bf16.mxu0 0
    %250 = vmatpush1.bf16.msra.mxu0 0
    %251 = vmatprep.subr.bf16.mxu0 0
    %252 = vmatpush1.bf16.msra.mxu0 0
    %253 = vmatprep.subr.bf16.mxu0 0
    %254 = vmatpush1.bf16.msra.mxu0 0
    %255 = vmatprep.subr.bf16.mxu0 0
    %256 = vmatpush1.bf16.msra.mxu0 0
    %257 = vmatprep.subr.bf16.mxu0 0
    %258 = vmatpush1.bf16.msra.mxu0 0
    %259 = vmatprep.subr.bf16.mxu0 0
    %260 = vmatpush1.bf16.msra.mxu0 0
    %261 = vmatprep.subr.bf16.mxu0 0
    %262 = vmatpush1.bf16.msra.mxu0 0
    %263 = vmatprep.subr.bf16.mxu0 0
    %264 = vmatpush1.bf16.msra.mxu0 0
    %265 = vmatprep.subr.bf16.mxu0 0
    %266 = vmatpush1.bf16.msra.mxu0 0
    %267 = vmatprep.subr.bf16.mxu0 0
    %268 = vmatpush1.bf16.msra.mxu0 0
    %269 = vmatprep.subr.bf16.mxu0 0
    %270 = vmatpush1.bf16.msra.mxu0 0
    %271 = vmatprep.mubr.bf16.mxu0 0
    %272 = vmatmul.mubr.bf16.gmra.mrb[0].mxu0 %v237
    %v273 = vpop.f32.mrb[0].mxu0
    %v274 = vadd.f32 %v219, %v273
    %v275 = vpop.f32.mrb[0].mxu0
    %v276 = vpop.f32.mrb[0].mxu0
    %v277 = vadd.f32 %v222, %v276
    %v278 = vpop.f32.mrb[0].mxu0
    %279 = vdwg.mxu0
    %v280 = vld [vmem:[#allocation4] sm:$0xf]
    %v281 = vld [vmem:[#allocation4 + $0x4] sm:$0xf]
    %v282 = vunpack.c.l.bf16 %v280
    %v283 = vunpack.c.l.bf16 %v281
    %v284 = vadd.f32 %v274, %v282
    %v285 = vadd.f32 %v277, %v283
    %v286 = vld [vmem:[%s5] sm:$0x1]
    %v288 = vlaneseq
    %v289 = vshrl.u32 %v288, 7
    %v290 = vsub.s32 0, %v289
    %v291 = vrot.slane %v286, %v290
    %v293 = vadd.f32 %v284, %v291
    %v294 = vadd.f32 %v285, %v291
    %v295 = vmax.f32 %v293, 0.0
    %v296 = vmax.f32 %v294, 0.0
    %297 = vst [vmem:[%s6] sm:$0xff] %v295
    %298 = vst [vmem:[%s6 + $0x8] sm:$0xff] %v296
    // Predicated region
    $region149: #{hgat_forward.12} parent=1 // pred_check
      _
    $region150: #{hgat_forward.12} parent=1 // pred_check_branch
      %300 = sbr.rel (0) target = $region152
    $region151: #{hgat_forward.12} parent=1 // pred_region
      _
    $region152: #{hgat_forward.12} parent=1 // pred_fallthru
      _
    // Predicated region
    $region153: #{hgat_forward.12} parent=1 // pred_check
      _
    $region154: #{hgat_forward.12} parent=1 // pred_check_branch
      %302 = sbr.rel (0) target = $region156
    $region155: #{hgat_forward.12} parent=1 // pred_region
      _
    $region156: #{hgat_forward.12} parent=1 // pred_fallthru
      _

// kernel: hgat_forward.18
$region0: #{hgat_forward.18}
  #allocation0 [shape = 'u32[]', space=smem, size = 0x4, offset = 0x4, fixed_abs, tag = 'smem constant byte address 0x4 - core index']
  #allocation1 [shape = 'u32[144,128]{1,0:T(1,128)}', space=vmem, size = 0x12000, scoped, tag = 'internal scratch']
  %s0 = inlined_call_operand.vmem [shape: f32[2,2,8,128], index: 0, kind: input, shape index: {}]
  %s1 = inlined_call_operand.vmem [shape: f32[2,2,8,128], index: 1, kind: input, shape index: {}]
  %s2 = inlined_call_operand.vmem [shape: f32[2,1,128], index: 2, kind: input, shape index: {}]
  %s3 = inlined_call_operand.vmem [shape: f32[2,1,128], index: 3, kind: input, shape index: {}]
  %s4 = inlined_call_operand.vmem [shape: f32[8,128], index: 4, kind: input, shape index: {}]
  %s5 = inlined_call_operand.vmem [shape: f32[8,128], index: 5, kind: input, shape index: {}]
  %s6 = inlined_call_operand.vmem [shape: bf16[2,128,128], index: 6, kind: input, shape index: {}]
  %s7 = inlined_call_operand.vmem [shape: f32[2,1,128], index: 7, kind: input, shape index: {}]
  %s8 = inlined_call_operand.vmem [shape: bf16[128,128], index: 8, kind: input, shape index: {}]
  %s9 = inlined_call_operand.vmem [shape: f32[1,128], index: 9, kind: input, shape index: {}]
  %s10 = inlined_call_operand.vmem [shape: f32[2,2,8,128], index: 10, kind: output, shape index: {0}]
  %s11 = inlined_call_operand.vmem [shape: f32[2,2,8,128], index: 11, kind: output, shape index: {1}]
  %12 = xla_tuple %s10, %s11
  %s13 = sld [smem:[#allocation0]]
  $region81: #{hgat_forward.18} parent=0
    _
  %s15 = ssub.s32 1, %s13
  %s16 = scalar_select 0, %s15, %s13
  loop: start=0, step=1, limit=6
  $region2: #{hgat_forward.18} parent=0 // loop_pre_header
    _
  $region3: #{hgat_forward.18} parent=0 // loop_header
    %s18 = sphi 0, %s22
    %p19 = scmp.ge.s32.totalorder %s18, 6
    %s25 = sphi 0, %s37
    %s26 = sphi 0, %s33
    %s27 = sphi 0, %s25
    %s28 = sphi 0, %s26
    %s29 = sphi 0, %s27
    %s30 = sphi 0, %s28
    %s42 = sphi 0, %s44
    %s45 = sphi 0, %s42
    %s46 = sphi 0, %s45
    %s62 = sphi 0, %s46
    %s70 = sphi 0, %s72
    %s73 = sphi 0, %s70
    %s74 = sphi 0, %s73
    %s90 = sphi 0, %s74
    %s96 = sphi 0, %s98
    %s99 = sphi 0, %s96
    %s100 = sphi 0, %s99
    %s116 = sphi 0, %s100
    %s122 = sphi 0, %s124
    %s125 = sphi 0, %s122
    %s126 = sphi 0, %s125
    %s142 = sphi 0, %s126
    %s146 = sphi 0, %s146
    %s148 = sphi 0, %s146
    %s149 = sphi 0, %s148
    %s163 = sphi 0, %s149
    %s167 = sphi 0, %s167
    %s169 = sphi 0, %s167
    %s170 = sphi 0, %s169
    %s184 = sphi 0, %s170
    %s190 = sphi 0, %s192
    %s193 = sphi 0, %s190
    %s194 = sphi 0, %s193
    %s210 = sphi 0, %s194
    %s216 = sphi 0, %s218
    %s219 = sphi 0, %s216
    %s220 = sphi 0, %s219
    %s236 = sphi 0, %s220
    %s240 = sphi 0, %s240
    %s242 = sphi 0, %s240
    %s243 = sphi 0, %s242
    %s257 = sphi 0, %s243
    %s261 = sphi 0, %s261
    %s263 = sphi 0, %s261
    %s264 = sphi 0, %s263
    %s278 = sphi 0, %s264
    %s286 = sphi 0, %s288
    %s289 = sphi 0, %s286
    %s290 = sphi 0, %s289
    %s306 = sphi 0, %s290
    %s314 = sphi 0, %s316
    %s317 = sphi 0, %s314
    %s318 = sphi 0, %s317
    %s334 = sphi 0, %s318
  $region4: #{hgat_forward.18} parent=0 // loop_header_branch
    %21 = sbr.rel (%p19) target = $region8
  $region5: #{hgat_forward.18} parent=0 // loop_body
    %s23 = ssub.s32 %s18, 1
    %s24 = ssub.s32 %s18, 2
    %s31 = sadd.s32 1, %s26
    %p32 = scmp.ge.s32.totalorder %s31, 2
    %s33 = scalar_select %p32, 0, %s31
    %s34 = sadd.s32 1, %s25
    %s35 = scalar_select %p32, %s34, %s25
    %p36 = scmp.ge.s32.totalorder %s35, 2
    %s37 = scalar_select %p36, 0, %s35
    %s38 = ssub.s32 %s25, %s37
    %s39 = ssub.s32 %s26, %s33
    %s40 = sor.u32 %s38, %s39
    %p41 = scmp.eq.s32.totalorder %s40, 0
    %s43 = sadd.s32 %s42, 1
    %s44 = scalar_select %p41, %s42, %s43
    %p47 = pneg %p41
    %p48 = scmp.eq.s32.totalorder %s18, 3
    %p49 = por %p47, %p48
    %p50 = scmp.ne.s32.totalorder %s42, %s45
    %p51 = scmp.eq.s32.totalorder %s18, 0
    %p52 = por %p50, %p51
    %p53 = scmp.ne.s32.totalorder %s42, %s45
    %p54 = scmp.eq.s32.totalorder %s23, 3
    %p55 = por %p53, %p54
    %p56 = scmp.ne.s32.totalorder %s45, %s46
    %p57 = scmp.eq.s32.totalorder %s23, 0
    %p58 = por %p56, %p57
    %p59 = scmp.ne.s32.totalorder %s45, %s46
    %p60 = scmp.eq.s32.totalorder %s24, 3
    %p61 = por %p59, %p60
    %p63 = scmp.ne.s32.totalorder %s46, %s62
    %p64 = scmp.eq.s32.totalorder %s24, 0
    %p65 = por %p63, %p64
    %s66 = ssub.s32 %s25, %s37
    %s67 = ssub.s32 %s26, %s33
    %s68 = sor.u32 %s66, %s67
    %p69 = scmp.eq.s32.totalorder %s68, 0
    %s71 = sadd.s32 %s70, 1
    %s72 = scalar_select %p69, %s70, %s71
    %p75 = pneg %p69
    %p76 = scmp.eq.s32.totalorder %s18, 3
    %p77 = por %p75, %p76
    %p78 = scmp.ne.s32.totalorder %s70, %s73
    %p79 = scmp.eq.s32.totalorder %s18, 0
    %p80 = por %p78, %p79
    %p81 = scmp.ne.s32.totalorder %s70, %s73
    %p82 = scmp.eq.s32.totalorder %s23, 3
    %p83 = por %p81, %p82
    %p84 = scmp.ne.s32.totalorder %s73, %s74
    %p85 = scmp.eq.s32.totalorder %s23, 0
    %p86 = por %p84, %p85
    %p87 = scmp.ne.s32.totalorder %s73, %s74
    %p88 = scmp.eq.s32.totalorder %s24, 3
    %p89 = por %p87, %p88
    %p91 = scmp.ne.s32.totalorder %s74, %s90
    %p92 = scmp.eq.s32.totalorder %s24, 0
    %p93 = por %p91, %p92
    %s94 = ssub.s32 %s25, %s37
    %p95 = scmp.eq.s32.totalorder %s94, 0
    %s97 = sadd.s32 %s96, 1
    %s98 = scalar_select %p95, %s96, %s97
    %p101 = pneg %p95
    %p102 = scmp.eq.s32.totalorder %s18, 3
    %p103 = por %p101, %p102
    %p104 = scmp.ne.s32.totalorder %s96, %s99
    %p105 = scmp.eq.s32.totalorder %s18, 0
    %p106 = por %p104, %p105
    %p107 = scmp.ne.s32.totalorder %s96, %s99
    %p108 = scmp.eq.s32.totalorder %s23, 3
    %p109 = por %p107, %p108
    %p110 = scmp.ne.s32.totalorder %s99, %s100
    %p111 = scmp.eq.s32.totalorder %s23, 0
    %p112 = por %p110, %p111
    %p113 = scmp.ne.s32.totalorder %s99, %s100
    %p114 = scmp.eq.s32.totalorder %s24, 3
    %p115 = por %p113, %p114
    %p117 = scmp.ne.s32.totalorder %s100, %s116
    %p118 = scmp.eq.s32.totalorder %s24, 0
    %p119 = por %p117, %p118
    %s120 = ssub.s32 %s25, %s37
    %p121 = scmp.eq.s32.totalorder %s120, 0
    %s123 = sadd.s32 %s122, 1
    %s124 = scalar_select %p121, %s122, %s123
    %p127 = pneg %p121
    %p128 = scmp.eq.s32.totalorder %s18, 3
    %p129 = por %p127, %p128
    %p130 = scmp.ne.s32.totalorder %s122, %s125
    %p131 = scmp.eq.s32.totalorder %s18, 0
    %p132 = por %p130, %p131
    %p133 = scmp.ne.s32.totalorder %s122, %s125
    %p134 = scmp.eq.s32.totalorder %s23, 3
    %p135 = por %p133, %p134
    %p136 = scmp.ne.s32.totalorder %s125, %s126
    %p137 = scmp.eq.s32.totalorder %s23, 0
    %p138 = por %p136, %p137
    %p139 = scmp.ne.s32.totalorder %s125, %s126
    %p140 = scmp.eq.s32.totalorder %s24, 3
    %p141 = por %p139, %p140
    %p143 = scmp.ne.s32.totalorder %s126, %s142
    %p144 = scmp.eq.s32.totalorder %s24, 0
    %p145 = por %p143, %p144
    %s147 = sadd.s32 %s146, 1
    %p150 = scmp.eq.s32.totalorder %s18, 3
    %p151 = scmp.ne.s32.totalorder %s146, %s148
    %p152 = scmp.eq.s32.totalorder %s18, 0
    %p153 = por %p151, %p152
    %p154 = scmp.ne.s32.totalorder %s146, %s148
    %p155 = scmp.eq.s32.totalorder %s23, 3
    %p156 = por %p154, %p155
    %p157 = scmp.ne.s32.totalorder %s148, %s149
    %p158 = scmp.eq.s32.totalorder %s23, 0
    %p159 = por %p157, %p158
    %p160 = scmp.ne.s32.totalorder %s148, %s149
    %p161 = scmp.eq.s32.totalorder %s24, 3
    %p162 = por %p160, %p161
    %p164 = scmp.ne.s32.totalorder %s149, %s163
    %p165 = scmp.eq.s32.totalorder %s24, 0
    %p166 = por %p164, %p165
    %s168 = sadd.s32 %s167, 1
    %p171 = scmp.eq.s32.totalorder %s18, 3
    %p172 = scmp.ne.s32.totalorder %s167, %s169
    %p173 = scmp.eq.s32.totalorder %s18, 0
    %p174 = por %p172, %p173
    %p175 = scmp.ne.s32.totalorder %s167, %s169
    %p176 = scmp.eq.s32.totalorder %s23, 3
    %p177 = por %p175, %p176
    %p178 = scmp.ne.s32.totalorder %s169, %s170
    %p179 = scmp.eq.s32.totalorder %s23, 0
    %p180 = por %p178, %p179
    %p181 = scmp.ne.s32.totalorder %s169, %s170
    %p182 = scmp.eq.s32.totalorder %s24, 3
    %p183 = por %p181, %p182
    %p185 = scmp.ne.s32.totalorder %s170, %s184
    %p186 = scmp.eq.s32.totalorder %s24, 0
    %p187 = por %p185, %p186
    %s188 = ssub.s32 %s25, %s37
    %p189 = scmp.eq.s32.totalorder %s188, 0
    %s191 = sadd.s32 %s190, 1
    %s192 = scalar_select %p189, %s190, %s191
    %p195 = pneg %p189
    %p196 = scmp.eq.s32.totalorder %s18, 3
    %p197 = por %p195, %p196
    %p198 = scmp.ne.s32.totalorder %s190, %s193
    %p199 = scmp.eq.s32.totalorder %s18, 0
    %p200 = por %p198, %p199
    %p201 = scmp.ne.s32.totalorder %s190, %s193
    %p202 = scmp.eq.s32.totalorder %s23, 3
    %p203 = por %p201, %p202
    %p204 = scmp.ne.s32.totalorder %s193, %s194
    %p205 = scmp.eq.s32.totalorder %s23, 0
    %p206 = por %p204, %p205
    %p207 = scmp.ne.s32.totalorder %s193, %s194
    %p208 = scmp.eq.s32.totalorder %s24, 3
    %p209 = por %p207, %p208
    %p211 = scmp.ne.s32.totalorder %s194, %s210
    %p212 = scmp.eq.s32.totalorder %s24, 0
    %p213 = por %p211, %p212
    %s214 = ssub.s32 %s25, %s37
    %p215 = scmp.eq.s32.totalorder %s214, 0
    %s217 = sadd.s32 %s216, 1
    %s218 = scalar_select %p215, %s216, %s217
    %p221 = pneg %p215
    %p222 = scmp.eq.s32.totalorder %s18, 3
    %p223 = por %p221, %p222
    %p224 = scmp.ne.s32.totalorder %s216, %s219
    %p225 = scmp.eq.s32.totalorder %s18, 0
    %p226 = por %p224, %p225
    %p227 = scmp.ne.s32.totalorder %s216, %s219
    %p228 = scmp.eq.s32.totalorder %s23, 3
    %p229 = por %p227, %p228
    %p230 = scmp.ne.s32.totalorder %s219, %s220
    %p231 = scmp.eq.s32.totalorder %s23, 0
    %p232 = por %p230, %p231
    %p233 = scmp.ne.s32.totalorder %s219, %s220
    %p234 = scmp.eq.s32.totalorder %s24, 3
    %p235 = por %p233, %p234
    %p237 = scmp.ne.s32.totalorder %s220, %s236
    %p238 = scmp.eq.s32.totalorder %s24, 0
    %p239 = por %p237, %p238
    %s241 = sadd.s32 %s240, 1
    %p244 = scmp.eq.s32.totalorder %s18, 3
    %p245 = scmp.ne.s32.totalorder %s240, %s242
    %p246 = scmp.eq.s32.totalorder %s18, 0
    %p247 = por %p245, %p246
    %p248 = scmp.ne.s32.totalorder %s240, %s242
    %p249 = scmp.eq.s32.totalorder %s23, 3
    %p250 = por %p248, %p249
    %p251 = scmp.ne.s32.totalorder %s242, %s243
    %p252 = scmp.eq.s32.totalorder %s23, 0
    %p253 = por %p251, %p252
    %p254 = scmp.ne.s32.totalorder %s242, %s243
    %p255 = scmp.eq.s32.totalorder %s24, 3
    %p256 = por %p254, %p255
    %p258 = scmp.ne.s32.totalorder %s243, %s257
    %p259 = scmp.eq.s32.totalorder %s24, 0
    %p260 = por %p258, %p259
    %s262 = sadd.s32 %s261, 1
    %p265 = scmp.eq.s32.totalorder %s18, 3
    %p266 = scmp.ne.s32.totalorder %s261, %s263
    %p267 = scmp.eq.s32.totalorder %s18, 0
    %p268 = por %p266, %p267
    %p269 = scmp.ne.s32.totalorder %s261, %s263
    %p270 = scmp.eq.s32.totalorder %s23, 3
    %p271 = por %p269, %p270
    %p272 = scmp.ne.s32.totalorder %s263, %s264
    %p273 = scmp.eq.s32.totalorder %s23, 0
    %p274 = por %p272, %p273
    %p275 = scmp.ne.s32.totalorder %s263, %s264
    %p276 = scmp.eq.s32.totalorder %s24, 3
    %p277 = por %p275, %p276
    %p279 = scmp.ne.s32.totalorder %s264, %s278
    %p280 = scmp.eq.s32.totalorder %s24, 0
    %p281 = por %p279, %p280
    %s282 = ssub.s32 %s25, %s37
    %s283 = ssub.s32 %s26, %s33
    %s284 = sor.u32 %s282, %s283
    %p285 = scmp.eq.s32.totalorder %s284, 0
    %s287 = sadd.s32 %s286, 1
    %s288 = scalar_select %p285, %s286, %s287
    %p291 = pneg %p285
    %p292 = scmp.eq.s32.totalorder %s18, 3
    %p293 = por %p291, %p292
    %p294 = scmp.ne.s32.totalorder %s286, %s289
    %p295 = scmp.eq.s32.totalorder %s18, 0
    %p296 = por %p294, %p295
    %p297 = scmp.ne.s32.totalorder %s286, %s289
    %p298 = scmp.eq.s32.totalorder %s23, 3
    %p299 = por %p297, %p298
    %p300 = scmp.ne.s32.totalorder %s289, %s290
    %p301 = scmp.eq.s32.totalorder %s23, 0
    %p302 = por %p300, %p301
    %p303 = scmp.ne.s32.totalorder %s289, %s290
    %p304 = scmp.eq.s32.totalorder %s24, 3
    %p305 = por %p303, %p304
    %p307 = scmp.ne.s32.totalorder %s290, %s306
    %p308 = scmp.eq.s32.totalorder %s24, 0
    %p309 = por %p307, %p308
    %s310 = ssub.s32 %s25, %s37
    %s311 = ssub.s32 %s26, %s33
    %s312 = sor.u32 %s310, %s311
    %p313 = scmp.eq.s32.totalorder %s312, 0
    %s315 = sadd.s32 %s314, 1
    %s316 = scalar_select %p313, %s314, %s315
    %p319 = pneg %p313
    %p320 = scmp.eq.s32.totalorder %s18, 3
    %p321 = por %p319, %p320
    %p322 = scmp.ne.s32.totalorder %s314, %s317
    %p323 = scmp.eq.s32.totalorder %s18, 0
    %p324 = por %p322, %p323
    %p325 = scmp.ne.s32.totalorder %s314, %s317
    %p326 = scmp.eq.s32.totalorder %s23, 3
    %p327 = por %p325, %p326
    %p328 = scmp.ne.s32.totalorder %s317, %s318
    %p329 = scmp.eq.s32.totalorder %s23, 0
    %p330 = por %p328, %p329
    %p331 = scmp.ne.s32.totalorder %s317, %s318
    %p332 = scmp.eq.s32.totalorder %s24, 3
    %p333 = por %p331, %p332
    %p335 = scmp.ne.s32.totalorder %s318, %s334
    %p336 = scmp.eq.s32.totalorder %s24, 0
    %p337 = por %p335, %p336
    %p338 = scmp.le.s32.totalorder 1, %s18
    %p339 = scmp.lt.s32.totalorder %s18, 5
    %p340 = pnand %p338, %p339
    %p341 = pneg %p340
    // Predicated region
    $region9: #{hgat_forward.18} parent=5 // pred_check
      _
    $region10: #{hgat_forward.18} parent=5 // pred_check_branch
      %343 = sbr.rel (%p340) target = $region12
    $region11: #{hgat_forward.18} parent=5 // pred_region
      %s344 = ssub.s32 %s18, 1
      // Predicated region
      $region13: #{hgat_forward.18} parent=11 // pred_check
        %p345 = pneg %p159
      $region14: #{hgat_forward.18} parent=11 // pred_check_branch
        %347 = sbr.rel (%p345) target = $region16
      $region15: #{hgat_forward.18} parent=11 // pred_region
        _
      $region16: #{hgat_forward.18} parent=11 // pred_fallthru
        _
      // Predicated region
      $region17: #{hgat_forward.18} parent=11 // pred_check
        %p348 = pneg %p180
      $region18: #{hgat_forward.18} parent=11 // pred_check_branch
        %350 = sbr.rel (%p348) target = $region20
      $region19: #{hgat_forward.18} parent=11 // pred_region
        _
      $region20: #{hgat_forward.18} parent=11 // pred_fallthru
        _
      // Predicated region
      $region21: #{hgat_forward.18} parent=11 // pred_check
        %p351 = pneg %p253
      $region22: #{hgat_forward.18} parent=11 // pred_check_branch
        %353 = sbr.rel (%p351) target = $region24
      $region23: #{hgat_forward.18} parent=11 // pred_region
        _
      $region24: #{hgat_forward.18} parent=11 // pred_fallthru
        _
      // Predicated region
      $region25: #{hgat_forward.18} parent=11 // pred_check
        %p354 = pneg %p274
      $region26: #{hgat_forward.18} parent=11 // pred_check_branch
        %356 = sbr.rel (%p354) target = $region28
      $region27: #{hgat_forward.18} parent=11 // pred_region
        _
      $region28: #{hgat_forward.18} parent=11 // pred_fallthru
        _
    $region12: #{hgat_forward.18} parent=5 // pred_fallthru
      _
    %p357 = scmp.lt.s32.totalorder %s18, 4
    // Predicated region
    $region29: #{hgat_forward.18} parent=5 // pred_check
      %p358 = pneg %p357
    $region30: #{hgat_forward.18} parent=5 // pred_check_branch
      %360 = sbr.rel (%p358) target = $region32
    $region31: #{hgat_forward.18} parent=5 // pred_region
      // Predicated region
      $region33: #{hgat_forward.18} parent=31 // pred_check
        %p361 = pneg %p52
      $region34: #{hgat_forward.18} parent=31 // pred_check_branch
        %363 = sbr.rel (%p361) target = $region36
      $region35: #{hgat_forward.18} parent=31 // pred_region
        %p364 = scmp.lt.s32.totalorder %s25, 1
        %s365 = scalar_select %p364, %s25, 1
        %p366 = scmp.lt.s32.totalorder %s26, 1
        %s367 = scalar_select %p366, %s26, 1
        %s368 = smul.addr %s365, 2
        %s369 = sadd.s32 %s367, %s368
        %s370 = smul.addr %s369, 8
        %s371 = scalar_lea.vmem %s0, %s370
      $region36: #{hgat_forward.18} parent=31 // pred_fallthru
        _
      // Predicated region
      $region37: #{hgat_forward.18} parent=31 // pred_check
        %p372 = pneg %p80
      $region38: #{hgat_forward.18} parent=31 // pred_check_branch
        %374 = sbr.rel (%p372) target = $region40
      $region39: #{hgat_forward.18} parent=31 // pred_region
        %p375 = scmp.lt.s32.totalorder %s25, 1
        %s376 = scalar_select %p375, %s25, 1
        %p377 = scmp.lt.s32.totalorder %s26, 1
        %s378 = scalar_select %p377, %s26, 1
        %s379 = smul.addr %s376, 2
        %s380 = sadd.s32 %s378, %s379
        %s381 = smul.addr %s380, 8
        %s382 = scalar_lea.vmem %s1, %s381
      $region40: #{hgat_forward.18} parent=31 // pred_fallthru
        _
      // Predicated region
      $region41: #{hgat_forward.18} parent=31 // pred_check
        %p383 = pneg %p106
      $region42: #{hgat_forward.18} parent=31 // pred_check_branch
        %385 = sbr.rel (%p383) target = $region44
      $region43: #{hgat_forward.18} parent=31 // pred_region
        %p386 = scmp.lt.s32.totalorder %s25, 1
        %s387 = scalar_select %p386, %s25, 1
        %s388 = scalar_lea.vmem %s2, %s387
      $region44: #{hgat_forward.18} parent=31 // pred_fallthru
        _
      // Predicated region
      $region45: #{hgat_forward.18} parent=31 // pred_check
        %p389 = pneg %p132
      $region46: #{hgat_forward.18} parent=31 // pred_check_branch
        %391 = sbr.rel (%p389) target = $region48
      $region47: #{hgat_forward.18} parent=31 // pred_region
        %p392 = scmp.lt.s32.totalorder %s25, 1
        %s393 = scalar_select %p392, %s25, 1
        %s394 = scalar_lea.vmem %s3, %s393
      $region48: #{hgat_forward.18} parent=31 // pred_fallthru
        _
      // Predicated region
      $region49: #{hgat_forward.18} parent=31 // pred_check
        %p395 = pneg %p200
      $region50: #{hgat_forward.18} parent=31 // pred_check_branch
        %397 = sbr.rel (%p395) target = $region52
      $region51: #{hgat_forward.18} parent=31 // pred_region
        %p398 = scmp.lt.s32.totalorder %s25, 1
        %s399 = scalar_select %p398, %s25, 1
        %s400 = smul.addr %s399, 16
        %s401 = smul.addr %s400, 4
        %s402 = scalar_lea.vmem %s6, %s401
      $region52: #{hgat_forward.18} parent=31 // pred_fallthru
        _
      // Predicated region
      $region53: #{hgat_forward.18} parent=31 // pred_check
        %p403 = pneg %p226
      $region54: #{hgat_forward.18} parent=31 // pred_check_branch
        %405 = sbr.rel (%p403) target = $region56
      $region55: #{hgat_forward.18} parent=31 // pred_region
        %p406 = scmp.lt.s32.totalorder %s25, 1
        %s407 = scalar_select %p406, %s25, 1
        %s408 = scalar_lea.vmem %s7, %s407
      $region56: #{hgat_forward.18} parent=31 // pred_fallthru
        _
    $region32: #{hgat_forward.18} parent=5 // pred_fallthru
      _
    %p409 = scmp.le.s32.totalorder 1, %s18
    %p410 = scmp.lt.s32.totalorder %s18, 5
    %p411 = pnand %p409, %p410
    %p412 = pneg %p411
    // Predicated region
    $region57: #{hgat_forward.18} parent=5 // pred_check
      _
    $region58: #{hgat_forward.18} parent=5 // pred_check_branch
      %414 = sbr.rel (%p411) target = $region60
    $region59: #{hgat_forward.18} parent=5 // pred_region
      %s415 = ssub.s32 %s18, 1
      %p416 = scmp.lt.s32.totalorder %s27, 1
      %s417 = scalar_select %p416, %s27, 1
      %p418 = scmp.lt.s32.totalorder %s28, 1
      %s419 = scalar_select %p418, %s28, 1
      %s420 = smul.addr %s417, 2
      %s421 = sadd.s32 %s419, %s420
      %s422 = smul.addr %s421, 8
      %s423 = scalar_lea.vmem %s0, %s422
      %p424 = pneg %p58
      %p425 = pneg %p55
      %p426 = scmp.lt.s32.totalorder %s27, 1
      %s427 = scalar_select %p426, %s27, 1
      %p428 = scmp.lt.s32.totalorder %s28, 1
      %s429 = scalar_select %p428, %s28, 1
      %s430 = smul.addr %s427, 2
      %s431 = sadd.s32 %s429, %s430
      %s432 = smul.addr %s431, 8
      %s433 = scalar_lea.vmem %s1, %s432
      %p434 = pneg %p86
      %p435 = pneg %p83
      %p436 = scmp.lt.s32.totalorder %s27, 1
      %s437 = scalar_select %p436, %s27, 1
      %s438 = scalar_lea.vmem %s2, %s437
      %p439 = pneg %p112
      %p440 = pneg %p109
      %p441 = scmp.lt.s32.totalorder %s27, 1
      %s442 = scalar_select %p441, %s27, 1
      %s443 = scalar_lea.vmem %s3, %s442
      %p444 = pneg %p138
      %p445 = pneg %p135
      %p446 = pneg %p159
      %p447 = pneg %p156
      %p448 = pneg %p180
      %p449 = pneg %p177
      %p450 = scmp.lt.s32.totalorder %s27, 1
      %s451 = scalar_select %p450, %s27, 1
      %s452 = smul.addr %s451, 16
      %s453 = smul.addr %s452, 4
      %s454 = scalar_lea.vmem %s6, %s453
      %p455 = pneg %p206
      %p456 = pneg %p203
      %p457 = scmp.lt.s32.totalorder %s27, 1
      %s458 = scalar_select %p457, %s27, 1
      %s459 = scalar_lea.vmem %s7, %s458
      %p460 = pneg %p232
      %p461 = pneg %p229
      %p462 = pneg %p253
      %p463 = pneg %p250
      %p464 = pneg %p274
      %p465 = pneg %p271
      %p466 = pneg %p302
      %p467 = pneg %p299
      %p468 = scmp.lt.s32.totalorder %s27, 1
      %s469 = scalar_select %p468, %s27, 1
      %p470 = scmp.lt.s32.totalorder %s28, 1
      %s471 = scalar_select %p470, %s28, 1
      %s472 = smul.addr %s469, 2
      %s473 = sadd.s32 %s471, %s472
      %s474 = smul.addr %s473, 8
      %s475 = scalar_lea.vmem %s10, %s474
      %p476 = pneg %p330
      %p477 = pneg %p327
      %p478 = scmp.lt.s32.totalorder %s27, 1
      %s479 = scalar_select %p478, %s27, 1
      %p480 = scmp.lt.s32.totalorder %s28, 1
      %s481 = scalar_select %p480, %s28, 1
      %s482 = smul.addr %s479, 2
      %s483 = sadd.s32 %s481, %s482
      %s484 = smul.addr %s483, 8
      %s485 = scalar_lea.vmem %s11, %s484
      %p486 = scmp.lt.s32.totalorder %s27, 1
      %s487 = scalar_select %p486, %s27, 1
      %p488 = scmp.lt.s32.totalorder %s28, 1
      %s489 = scalar_select %p488, %s28, 1
      %s490 = smul.addr %s487, 2
      %s491 = sadd.s32 %s489, %s490
      %s492 = smul.addr %s491, 8
      %s493 = scalar_lea.vmem %s0, %s492
      %p494 = scmp.lt.s32.totalorder %s27, 1
      %s495 = scalar_select %p494, %s27, 1
      %p496 = scmp.lt.s32.totalorder %s28, 1
      %s497 = scalar_select %p496, %s28, 1
      %s498 = smul.addr %s495, 2
      %s499 = sadd.s32 %s497, %s498
      %s500 = smul.addr %s499, 8
      %s501 = scalar_lea.vmem %s1, %s500
      %p502 = scmp.lt.s32.totalorder %s27, 1
      %s503 = scalar_select %p502, %s27, 1
      %s504 = scalar_lea.vmem %s2, %s503
      %p505 = scmp.lt.s32.totalorder %s27, 1
      %s506 = scalar_select %p505, %s27, 1
      %s507 = scalar_lea.vmem %s3, %s506
      %p508 = scmp.lt.s32.totalorder %s27, 1
      %s509 = scalar_select %p508, %s27, 1
      %s510 = smul.addr %s509, 16
      %s511 = smul.addr %s510, 4
      %s512 = scalar_lea.vmem %s6, %s511
      %p513 = scmp.lt.s32.totalorder %s27, 1
      %s514 = scalar_select %p513, %s27, 1
      %s515 = scalar_lea.vmem %s7, %s514
      %p516 = scmp.lt.s32.totalorder %s27, 1
      %s517 = scalar_select %p516, %s27, 1
      %p518 = scmp.lt.s32.totalorder %s28, 1
      %s519 = scalar_select %p518, %s28, 1
      %s520 = smul.addr %s517, 2
      %s521 = sadd.s32 %s519, %s520
      %s522 = smul.addr %s521, 8
      %s523 = scalar_lea.vmem %s10, %s522
      %p524 = scmp.lt.s32.totalorder %s27, 1
      %s525 = scalar_select %p524, %s27, 1
      %p526 = scmp.lt.s32.totalorder %s28, 1
      %s527 = scalar_select %p526, %s28, 1
      %s528 = smul.addr %s525, 2
      %s529 = sadd.s32 %s527, %s528
      %s530 = smul.addr %s529, 8
      %s531 = scalar_lea.vmem %s11, %s530
      %v533 = vld [vmem:[%s493] sm:$0xff]
      %v534 = vld [vmem:[%s501] sm:$0xff]
      %v535 = vadd.f32 %v533, %v534
      %536 = vadd.xlane.f32.xlu0 %v535
      %v537 = vpop.xlane.xlu0 %536
      %v538 = vrcp.pop 128.0
      %v539 = vmul.f32 %v537, %v538
      %v540 = vsub.f32 %v535, %v539
      %v541 = vmul.f32 %v540, %v540
      %542 = vadd.xlane.f32.xlu0 %v541
      %v543 = vpop.xlane.xlu0 %542
      %v544 = vmul.f32 %v543, %v538
      %v545 = vadd.f32 %v544, 1e-05
      %v546 = vrsqrt.pop %v545
      %v547 = vmul.f32 %v540, %v546
      %v548 = vld [vmem:[%s504] sm:$0x1]
      %v550 = vlaneseq
      %v551 = vshrl.u32 %v550, 7
      %v552 = vsub.s32 0, %v551
      %v553 = vrot.slane %v548, %v552
      %v555 = vmul.f32 %v547, %v553
      %v556 = vld [vmem:[%s507] sm:$0x1]
      %v558 = vlaneseq
      %v559 = vshrl.u32 %v558, 7
      %v560 = vsub.s32 0, %v559
      %v561 = vrot.slane %v556, %v560
      %v563 = vadd.f32 %v555, %v561
      %v564 = vpack.c.bf16 %v563, %v563
      %v565 = vld [vmem:[%s8] sm:$0xf]
      %v566 = vld [vmem:[%s8 + $0x4] sm:$0xf]
      %v567 = vld [vmem:[%s8 + $0x8] sm:$0xf]
      %v568 = vld [vmem:[%s8 + $0xc] sm:$0xf]
      %v569 = vld [vmem:[%s8 + $0x10] sm:$0xf]
      %v570 = vld [vmem:[%s8 + $0x14] sm:$0xf]
      %v571 = vld [vmem:[%s8 + $0x18] sm:$0xf]
      %v572 = vld [vmem:[%s8 + $0x1c] sm:$0xf]
      %v573 = vld [vmem:[%s8 + $0x20] sm:$0xf]
      %v574 = vld [vmem:[%s8 + $0x24] sm:$0xf]
      %v575 = vld [vmem:[%s8 + $0x28] sm:$0xf]
      %v576 = vld [vmem:[%s8 + $0x2c] sm:$0xf]
      %v577 = vld [vmem:[%s8 + $0x30] sm:$0xf]
      %v578 = vld [vmem:[%s8 + $0x34] sm:$0xf]
      %v579 = vld [vmem:[%s8 + $0x38] sm:$0xf]
      %v580 = vld [vmem:[%s8 + $0x3c] sm:$0xf]
      %v581 = vld [vmem:[%s9] sm:$0x1]
      %v583 = vlaneseq
      %v584 = vshrl.u32 %v583, 7
      %v585 = vsub.s32 0, %v584
      %v586 = vrot.slane %v581, %v585
      %v604 = vunpack.c.l.b16 %v565
      %v605 = vunpack.c.l.b16 %v566
      %v606 = vunpack.c.l.b16 %v567
      %v607 = vunpack.c.l.b16 %v568
      %v608 = vunpack.c.l.b16 %v569
      %v609 = vunpack.c.l.b16 %v570
      %v610 = vunpack.c.l.b16 %v571
      %v611 = vunpack.c.l.b16 %v572
      %v612 = vunpack.c.l.b16 %v573
      %v613 = vunpack.c.l.b16 %v574
      %v614 = vunpack.c.l.b16 %v575
      %v615 = vunpack.c.l.b16 %v576
      %v616 = vunpack.c.l.b16 %v577
      %v617 = vunpack.c.l.b16 %v578
      %v618 = vunpack.c.l.b16 %v579
      %v619 = vunpack.c.l.b16 %v580
      %v620 = vpack.c.b16 %v605, %v604
      %v621 = vpack.c.b16 %v607, %v606
      %v622 = vpack.c.b16 %v609, %v608
      %v623 = vpack.c.b16 %v611, %v610
      %v624 = vpack.c.b16 %v613, %v612
      %v625 = vpack.c.b16 %v615, %v614
      %v626 = vpack.c.b16 %v617, %v616
      %v627 = vpack.c.b16 %v619, %v618
      %636 = vmatprep.subr.bf16.mxu0 0
      %637 = vmatpush1.bf16.msra.mxu0 %v620
      %638 = vmatprep.subr.bf16.mxu0 0
      %639 = vmatpush1.bf16.msra.mxu0 %v621
      %640 = vmatprep.subr.bf16.mxu0 0
      %641 = vmatpush1.bf16.msra.mxu0 %v622
      %642 = vmatprep.subr.bf16.mxu0 0
      %643 = vmatpush1.bf16.msra.mxu0 %v623
      %644 = vmatprep.subr.bf16.mxu0 0
      %645 = vmatpush1.bf16.msra.mxu0 %v624
      %646 = vmatprep.subr.bf16.mxu0 0
      %647 = vmatpush1.bf16.msra.mxu0 %v625
      %648 = vmatprep.subr.bf16.mxu0 0
      %649 = vmatpush1.bf16.msra.mxu0 %v626
      %650 = vmatprep.subr.bf16.mxu0 0
      %651 = vmatpush1.bf16.msra.mxu0 %v627
      %652 = vmatprep.subr.bf16.mxu0 0
      %653 = vmatpush1.bf16.msra.mxu0 0
      %654 = vmatprep.subr.bf16.mxu0 0
      %655 = vmatpush1.bf16.msra.mxu0 0
      %656 = vmatprep.subr.bf16.mxu0 0
      %657 = vmatpush1.bf16.msra.mxu0 0
      %658 = vmatprep.subr.bf16.mxu0 0
      %659 = vmatpush1.bf16.msra.mxu0 0
      %660 = vmatprep.subr.bf16.mxu0 0
      %661 = vmatpush1.bf16.msra.mxu0 0
      %662 = vmatprep.subr.bf16.mxu0 0
      %663 = vmatpush1.bf16.msra.mxu0 0
      %664 = vmatprep.subr.bf16.mxu0 0
      %665 = vmatpush1.bf16.msra.mxu0 0
      %666 = vmatprep.subr.bf16.mxu0 0
      %667 = vmatpush1.bf16.msra.mxu0 0
      %668 = vmatprep.mubr.bf16.mxu0 0
      %669 = vmatmul.mubr.bf16.gmra.mrb[0].mxu0 %v564
      %v670 = vpop.f32.mrb[0].mxu0
      %v671 = vadd.f32 %v586, %v670
      %v672 = vpop.f32.mrb[0].mxu0
      %v673 = vpop.f32.mrb[0].mxu0
      %v674 = vpop.f32.mrb[0].mxu0
      %675 = vdwg.mxu0
      %676 = vst [vmem:[%s531] sm:$0xff] %v671
      %v677 = vlaneseq
      %v678 = vand.u32 %v677, 127
      %vm679 = vcmp.lt.s32.totalorder %v678, 0
      %v680 = vsub.s32 0, %v678
      %v681 = vsel %vm679, %v680, %v678
      %v682 = vshrl.u32 %v681, 1
      %v683 = vand.u32 %v681, 1
      %v684 = vsub.s32 0, %v683
      %v685 = vsel %vm679, %v684, %v683
      %vm686 = vcmp.ne.s32.totalorder %v685, 0
      %vm687 = vcmp.lt.s32.totalorder %v685, 0
      %vm688 = vmand %vm687, %vm686
      %v689 = vadd.s32 %v685, 2
      %v690 = vsel %vm688, %v689, %v685
      %vm691 = vcmp.eq.s32.totalorder %v690, 0
      %692 = vrot.lane.b32.xlu0 %v563, 127
      %v693 = vpop.permute.xlu0 %692
      %v694 = vsub.f32 0.0, %v693
      %695 = vrot.lane.b32.xlu0 %v563, 1
      %v696 = vpop.permute.xlu0 %695
      %v697 = vsel %vm691, %v694, %v696
      %v698 = vld [vmem:[%s4] sm:$0xff]
      %v699 = vmul.f32 %v563, %v698
      %v700 = vld [vmem:[%s5] sm:$0xff]
      %v701 = vmul.f32 %v697, %v700
      %v702 = vadd.f32 %v699, %v701
      %v703 = vpack.c.bf16 %v702, %v702
      %v704 = vld [vmem:[%s512] sm:$0xf]
      %v705 = vld [vmem:[%s512 + $0x4] sm:$0xf]
      %v706 = vld [vmem:[%s512 + $0x8] sm:$0xf]
      %v707 = vld [vmem:[%s512 + $0xc] sm:$0xf]
      %v708 = vld [vmem:[%s512 + $0x10] sm:$0xf]
      %v709 = vld [vmem:[%s512 + $0x14] sm:$0xf]
      %v710 = vld [vmem:[%s512 + $0x18] sm:$0xf]
      %v711 = vld [vmem:[%s512 + $0x1c] sm:$0xf]
      %v712 = vld [vmem:[%s512 + $0x20] sm:$0xf]
      %v713 = vld [vmem:[%s512 + $0x24] sm:$0xf]
      %v714 = vld [vmem:[%s512 + $0x28] sm:$0xf]
      %v715 = vld [vmem:[%s512 + $0x2c] sm:$0xf]
      %v716 = vld [vmem:[%s512 + $0x30] sm:$0xf]
      %v717 = vld [vmem:[%s512 + $0x34] sm:$0xf]
      %v718 = vld [vmem:[%s512 + $0x38] sm:$0xf]
      %v719 = vld [vmem:[%s512 + $0x3c] sm:$0xf]
      %v720 = vld [vmem:[%s515] sm:$0x1]
      %v722 = vlaneseq
      %v723 = vshrl.u32 %v722, 7
      %v724 = vsub.s32 0, %v723
      %v725 = vrot.slane %v720, %v724
      %v743 = vunpack.c.l.b16 %v704
      %v744 = vunpack.c.l.b16 %v705
      %v745 = vunpack.c.l.b16 %v706
      %v746 = vunpack.c.l.b16 %v707
      %v747 = vunpack.c.l.b16 %v708
      %v748 = vunpack.c.l.b16 %v709
      %v749 = vunpack.c.l.b16 %v710
      %v750 = vunpack.c.l.b16 %v711
      %v751 = vunpack.c.l.b16 %v712
      %v752 = vunpack.c.l.b16 %v713
      %v753 = vunpack.c.l.b16 %v714
      %v754 = vunpack.c.l.b16 %v715
      %v755 = vunpack.c.l.b16 %v716
      %v756 = vunpack.c.l.b16 %v717
      %v757 = vunpack.c.l.b16 %v718
      %v758 = vunpack.c.l.b16 %v719
      %v759 = vpack.c.b16 %v744, %v743
      %v760 = vpack.c.b16 %v746, %v745
      %v761 = vpack.c.b16 %v748, %v747
      %v762 = vpack.c.b16 %v750, %v749
      %v763 = vpack.c.b16 %v752, %v751
      %v764 = vpack.c.b16 %v754, %v753
      %v765 = vpack.c.b16 %v756, %v755
      %v766 = vpack.c.b16 %v758, %v757
      %775 = vmatprep.subr.bf16.mxu0 0
      %776 = vmatpush1.bf16.msra.mxu0 %v759
      %777 = vmatprep.subr.bf16.mxu0 0
      %778 = vmatpush1.bf16.msra.mxu0 %v760
      %779 = vmatprep.subr.bf16.mxu0 0
      %780 = vmatpush1.bf16.msra.mxu0 %v761
      %781 = vmatprep.subr.bf16.mxu0 0
      %782 = vmatpush1.bf16.msra.mxu0 %v762
      %783 = vmatprep.subr.bf16.mxu0 0
      %784 = vmatpush1.bf16.msra.mxu0 %v763
      %785 = vmatprep.subr.bf16.mxu0 0
      %786 = vmatpush1.bf16.msra.mxu0 %v764
      %787 = vmatprep.subr.bf16.mxu0 0
      %788 = vmatpush1.bf16.msra.mxu0 %v765
      %789 = vmatprep.subr.bf16.mxu0 0
      %790 = vmatpush1.bf16.msra.mxu0 %v766
      %791 = vmatprep.subr.bf16.mxu0 0
      %792 = vmatpush1.bf16.msra.mxu0 0
      %793 = vmatprep.subr.bf16.mxu0 0
      %794 = vmatpush1.bf16.msra.mxu0 0
      %795 = vmatprep.subr.bf16.mxu0 0
      %796 = vmatpush1.bf16.msra.mxu0 0
      %797 = vmatprep.subr.bf16.mxu0 0
      %798 = vmatpush1.bf16.msra.mxu0 0
      %799 = vmatprep.subr.bf16.mxu0 0
      %800 = vmatpush1.bf16.msra.mxu0 0
      %801 = vmatprep.subr.bf16.mxu0 0
      %802 = vmatpush1.bf16.msra.mxu0 0
      %803 = vmatprep.subr.bf16.mxu0 0
      %804 = vmatpush1.bf16.msra.mxu0 0
      %805 = vmatprep.subr.bf16.mxu0 0
      %806 = vmatpush1.bf16.msra.mxu0 0
      %807 = vmatprep.mubr.bf16.mxu0 0
      %808 = vmatmul.mubr.bf16.gmra.mrb[0].mxu0 %v703
      %v809 = vpop.f32.mrb[0].mxu0
      %v810 = vadd.f32 %v725, %v809
      %v811 = vpop.f32.mrb[0].mxu0
      %v812 = vpop.f32.mrb[0].mxu0
      %v813 = vpop.f32.mrb[0].mxu0
      %814 = vdwg.mxu0
      %815 = vst [vmem:[%s523] sm:$0xff] %v810
      %p816 = scmp.lt.s32.totalorder %s27, 1
      %s817 = scalar_select %p816, %s27, 1
      %p818 = scmp.lt.s32.totalorder %s28, 1
      %s819 = scalar_select %p818, %s28, 1
      %s820 = smul.addr %s817, 2
      %s821 = sadd.s32 %s819, %s820
      %s822 = smul.addr %s821, 8
      %s823 = scalar_lea.vmem %s10, %s822
      %p824 = scmp.lt.s32.totalorder %s27, 1
      %s825 = scalar_select %p824, %s27, 1
      %p826 = scmp.lt.s32.totalorder %s28, 1
      %s827 = scalar_select %p826, %s28, 1
      %s828 = smul.addr %s825, 2
      %s829 = sadd.s32 %s827, %s828
      %s830 = smul.addr %s829, 8
      %s831 = scalar_lea.vmem %s11, %s830
      // Predicated region
      $region61: #{hgat_forward.18} parent=59 // pred_check
        %p832 = pneg %p299
      $region62: #{hgat_forward.18} parent=59 // pred_check_branch
        %834 = sbr.rel (%p832) target = $region64
      $region63: #{hgat_forward.18} parent=59 // pred_region
        _
      $region64: #{hgat_forward.18} parent=59 // pred_fallthru
        _
      // Predicated region
      $region65: #{hgat_forward.18} parent=59 // pred_check
        %p835 = pneg %p327
      $region66: #{hgat_forward.18} parent=59 // pred_check_branch
        %837 = sbr.rel (%p835) target = $region68
      $region67: #{hgat_forward.18} parent=59 // pred_region
        _
      $region68: #{hgat_forward.18} parent=59 // pred_fallthru
        _
    $region60: #{hgat_forward.18} parent=5 // pred_fallthru
      _
    %p838 = scmp.le.s32.totalorder 2, %s18
    // Predicated region
    $region69: #{hgat_forward.18} parent=5 // pred_check
      %p839 = pneg %p838
    $region70: #{hgat_forward.18} parent=5 // pred_check_branch
      %841 = sbr.rel (%p839) target = $region72
    $region71: #{hgat_forward.18} parent=5 // pred_region
      %s842 = ssub.s32 %s18, 2
      // Predicated region
      $region73: #{hgat_forward.18} parent=71 // pred_check
        %p843 = pneg %p305
      $region74: #{hgat_forward.18} parent=71 // pred_check_branch
        %845 = sbr.rel (%p843) target = $region76
      $region75: #{hgat_forward.18} parent=71 // pred_region
        %p846 = scmp.lt.s32.totalorder %s29, 1
        %s847 = scalar_select %p846, %s29, 1
        %p848 = scmp.lt.s32.totalorder %s30, 1
        %s849 = scalar_select %p848, %s30, 1
        %s850 = smul.addr %s847, 2
        %s851 = sadd.s32 %s849, %s850
        %s852 = smul.addr %s851, 8
        %s853 = scalar_lea.vmem %s10, %s852
      $region76: #{hgat_forward.18} parent=71 // pred_fallthru
        _
      // Predicated region
      $region77: #{hgat_forward.18} parent=71 // pred_check
        %p854 = pneg %p333
      $region78: #{hgat_forward.18} parent=71 // pred_check_branch
        %856 = sbr.rel (%p854) target = $region80
      $region79: #{hgat_forward.18} parent=71 // pred_region
        %p857 = scmp.lt.s32.totalorder %s29, 1
        %s858 = scalar_select %p857, %s29, 1
        %p859 = scmp.lt.s32.totalorder %s30, 1
        %s860 = scalar_select %p859, %s30, 1
        %s861 = smul.addr %s858, 2
        %s862 = sadd.s32 %s860, %s861
        %s863 = smul.addr %s862, 8
        %s864 = scalar_lea.vmem %s11, %s863
      $region80: #{hgat_forward.18} parent=71 // pred_fallthru
        _
    $region72: #{hgat_forward.18} parent=5 // pred_fallthru
      _
  $region6: #{hgat_forward.18} parent=0 // loop_footer
    %s22 = sadd.s32 1, %s18
  $region7: #{hgat_forward.18} parent=0 // loop_footer_branch
    %17 = sbr.rel target = $region3
  $region8: #{hgat_forward.18} parent=0 // loop_exit
    _

// kernel: hgat_forward.19
$region0: #{hgat_forward.19}
  #allocation0 [shape = 'u32[]', space=smem, size = 0x4, offset = 0x4, fixed_abs, tag = 'smem constant byte address 0x4 - core index']
  #allocation1 [shape = 'u32[144,128]{1,0:T(1,128)}', space=vmem, size = 0x12000, scoped, tag = 'internal scratch']
  %s0 = inlined_call_operand.vmem [shape: f32[2,8,128], index: 0, kind: input, shape index: {}]
  %s1 = inlined_call_operand.vmem [shape: f32[2,8,128], index: 1, kind: input, shape index: {}]
  %s2 = inlined_call_operand.vmem [shape: bf16[128,128], index: 2, kind: input, shape index: {}]
  %s3 = inlined_call_operand.vmem [shape: f32[1,128], index: 3, kind: input, shape index: {}]
  %s4 = inlined_call_operand.vmem [shape: bf16[128,128], index: 4, kind: input, shape index: {}]
  %s5 = inlined_call_operand.vmem [shape: f32[1,128], index: 5, kind: input, shape index: {}]
  %s6 = inlined_call_operand.vmem [shape: bf16[8,128], index: 6, kind: input, shape index: {}]
  %s7 = inlined_call_operand.vmem [shape: f32[8,1], index: 7, kind: input, shape index: {}]
  %s8 = inlined_call_operand.vmem [shape: f32[2,8,64], index: 8, kind: output, shape index: {}]
  %s9 = sld [smem:[#allocation0]]
  $region65: #{hgat_forward.19} parent=0
    _
  %s11 = ssub.s32 1, %s9
  %s12 = scalar_select 0, %s11, %s9
  loop: start=0, step=1, limit=4
  $region2: #{hgat_forward.19} parent=0 // loop_pre_header
    _
  $region3: #{hgat_forward.19} parent=0 // loop_header
    %s14 = sphi 0, %s18
    %p15 = scmp.ge.s32.totalorder %s14, 4
    %s21 = sphi 0, %s33
    %s22 = sphi 0, %s29
    %s23 = sphi 0, %s21
    %s24 = sphi 0, %s22
    %s25 = sphi 0, %s23
    %s26 = sphi 0, %s24
    %s38 = sphi 0, %s40
    %s41 = sphi 0, %s38
    %s42 = sphi 0, %s41
    %s58 = sphi 0, %s42
    %s64 = sphi 0, %s66
    %s67 = sphi 0, %s64
    %s68 = sphi 0, %s67
    %s84 = sphi 0, %s68
    %s88 = sphi 0, %s88
    %s90 = sphi 0, %s88
    %s91 = sphi 0, %s90
    %s105 = sphi 0, %s91
    %s109 = sphi 0, %s109
    %s111 = sphi 0, %s109
    %s112 = sphi 0, %s111
    %s126 = sphi 0, %s112
    %s130 = sphi 0, %s130
    %s132 = sphi 0, %s130
    %s133 = sphi 0, %s132
    %s147 = sphi 0, %s133
    %s151 = sphi 0, %s151
    %s153 = sphi 0, %s151
    %s154 = sphi 0, %s153
    %s168 = sphi 0, %s154
    %s172 = sphi 0, %s172
    %s174 = sphi 0, %s172
    %s175 = sphi 0, %s174
    %s189 = sphi 0, %s175
    %s193 = sphi 0, %s193
    %s195 = sphi 0, %s193
    %s196 = sphi 0, %s195
    %s210 = sphi 0, %s196
    %s218 = sphi 0, %s220
    %s221 = sphi 0, %s218
    %s222 = sphi 0, %s221
    %s238 = sphi 0, %s222
  $region4: #{hgat_forward.19} parent=0 // loop_header_branch
    %17 = sbr.rel (%p15) target = $region8
  $region5: #{hgat_forward.19} parent=0 // loop_body
    %s19 = ssub.s32 %s14, 1
    %s20 = ssub.s32 %s14, 2
    %s27 = sadd.s32 1, %s22
    %p28 = scmp.ge.s32.totalorder %s27, 1
    %s29 = scalar_select %p28, 0, %s27
    %s30 = sadd.s32 1, %s21
    %s31 = scalar_select %p28, %s30, %s21
    %p32 = scmp.ge.s32.totalorder %s31, 2
    %s33 = scalar_select %p32, 0, %s31
    %s34 = ssub.s32 %s21, %s33
    %s35 = ssub.s32 %s22, %s29
    %s36 = sor.u32 %s34, %s35
    %p37 = scmp.eq.s32.totalorder %s36, 0
    %s39 = sadd.s32 %s38, 1
    %s40 = scalar_select %p37, %s38, %s39
    %p43 = pneg %p37
    %p44 = scmp.eq.s32.totalorder %s14, 1
    %p45 = por %p43, %p44
    %p46 = scmp.ne.s32.totalorder %s38, %s41
    %p47 = scmp.eq.s32.totalorder %s14, 0
    %p48 = por %p46, %p47
    %p49 = scmp.ne.s32.totalorder %s38, %s41
    %p50 = scmp.eq.s32.totalorder %s19, 1
    %p51 = por %p49, %p50
    %p52 = scmp.ne.s32.totalorder %s41, %s42
    %p53 = scmp.eq.s32.totalorder %s19, 0
    %p54 = por %p52, %p53
    %p55 = scmp.ne.s32.totalorder %s41, %s42
    %p56 = scmp.eq.s32.totalorder %s20, 1
    %p57 = por %p55, %p56
    %p59 = scmp.ne.s32.totalorder %s42, %s58
    %p60 = scmp.eq.s32.totalorder %s20, 0
    %p61 = por %p59, %p60
    %s62 = ssub.s32 %s21, %s33
    %p63 = scmp.eq.s32.totalorder %s62, 0
    %s65 = sadd.s32 %s64, 1
    %s66 = scalar_select %p63, %s64, %s65
    %p69 = pneg %p63
    %p70 = scmp.eq.s32.totalorder %s14, 1
    %p71 = por %p69, %p70
    %p72 = scmp.ne.s32.totalorder %s64, %s67
    %p73 = scmp.eq.s32.totalorder %s14, 0
    %p74 = por %p72, %p73
    %p75 = scmp.ne.s32.totalorder %s64, %s67
    %p76 = scmp.eq.s32.totalorder %s19, 1
    %p77 = por %p75, %p76
    %p78 = scmp.ne.s32.totalorder %s67, %s68
    %p79 = scmp.eq.s32.totalorder %s19, 0
    %p80 = por %p78, %p79
    %p81 = scmp.ne.s32.totalorder %s67, %s68
    %p82 = scmp.eq.s32.totalorder %s20, 1
    %p83 = por %p81, %p82
    %p85 = scmp.ne.s32.totalorder %s68, %s84
    %p86 = scmp.eq.s32.totalorder %s20, 0
    %p87 = por %p85, %p86
    %s89 = sadd.s32 %s88, 1
    %p92 = scmp.eq.s32.totalorder %s14, 1
    %p93 = scmp.ne.s32.totalorder %s88, %s90
    %p94 = scmp.eq.s32.totalorder %s14, 0
    %p95 = por %p93, %p94
    %p96 = scmp.ne.s32.totalorder %s88, %s90
    %p97 = scmp.eq.s32.totalorder %s19, 1
    %p98 = por %p96, %p97
    %p99 = scmp.ne.s32.totalorder %s90, %s91
    %p100 = scmp.eq.s32.totalorder %s19, 0
    %p101 = por %p99, %p100
    %p102 = scmp.ne.s32.totalorder %s90, %s91
    %p103 = scmp.eq.s32.totalorder %s20, 1
    %p104 = por %p102, %p103
    %p106 = scmp.ne.s32.totalorder %s91, %s105
    %p107 = scmp.eq.s32.totalorder %s20, 0
    %p108 = por %p106, %p107
    %s110 = sadd.s32 %s109, 1
    %p113 = scmp.eq.s32.totalorder %s14, 1
    %p114 = scmp.ne.s32.totalorder %s109, %s111
    %p115 = scmp.eq.s32.totalorder %s14, 0
    %p116 = por %p114, %p115
    %p117 = scmp.ne.s32.totalorder %s109, %s111
    %p118 = scmp.eq.s32.totalorder %s19, 1
    %p119 = por %p117, %p118
    %p120 = scmp.ne.s32.totalorder %s111, %s112
    %p121 = scmp.eq.s32.totalorder %s19, 0
    %p122 = por %p120, %p121
    %p123 = scmp.ne.s32.totalorder %s111, %s112
    %p124 = scmp.eq.s32.totalorder %s20, 1
    %p125 = por %p123, %p124
    %p127 = scmp.ne.s32.totalorder %s112, %s126
    %p128 = scmp.eq.s32.totalorder %s20, 0
    %p129 = por %p127, %p128
    %s131 = sadd.s32 %s130, 1
    %p134 = scmp.eq.s32.totalorder %s14, 1
    %p135 = scmp.ne.s32.totalorder %s130, %s132
    %p136 = scmp.eq.s32.totalorder %s14, 0
    %p137 = por %p135, %p136
    %p138 = scmp.ne.s32.totalorder %s130, %s132
    %p139 = scmp.eq.s32.totalorder %s19, 1
    %p140 = por %p138, %p139
    %p141 = scmp.ne.s32.totalorder %s132, %s133
    %p142 = scmp.eq.s32.totalorder %s19, 0
    %p143 = por %p141, %p142
    %p144 = scmp.ne.s32.totalorder %s132, %s133
    %p145 = scmp.eq.s32.totalorder %s20, 1
    %p146 = por %p144, %p145
    %p148 = scmp.ne.s32.totalorder %s133, %s147
    %p149 = scmp.eq.s32.totalorder %s20, 0
    %p150 = por %p148, %p149
    %s152 = sadd.s32 %s151, 1
    %p155 = scmp.eq.s32.totalorder %s14, 1
    %p156 = scmp.ne.s32.totalorder %s151, %s153
    %p157 = scmp.eq.s32.totalorder %s14, 0
    %p158 = por %p156, %p157
    %p159 = scmp.ne.s32.totalorder %s151, %s153
    %p160 = scmp.eq.s32.totalorder %s19, 1
    %p161 = por %p159, %p160
    %p162 = scmp.ne.s32.totalorder %s153, %s154
    %p163 = scmp.eq.s32.totalorder %s19, 0
    %p164 = por %p162, %p163
    %p165 = scmp.ne.s32.totalorder %s153, %s154
    %p166 = scmp.eq.s32.totalorder %s20, 1
    %p167 = por %p165, %p166
    %p169 = scmp.ne.s32.totalorder %s154, %s168
    %p170 = scmp.eq.s32.totalorder %s20, 0
    %p171 = por %p169, %p170
    %s173 = sadd.s32 %s172, 1
    %p176 = scmp.eq.s32.totalorder %s14, 1
    %p177 = scmp.ne.s32.totalorder %s172, %s174
    %p178 = scmp.eq.s32.totalorder %s14, 0
    %p179 = por %p177, %p178
    %p180 = scmp.ne.s32.totalorder %s172, %s174
    %p181 = scmp.eq.s32.totalorder %s19, 1
    %p182 = por %p180, %p181
    %p183 = scmp.ne.s32.totalorder %s174, %s175
    %p184 = scmp.eq.s32.totalorder %s19, 0
    %p185 = por %p183, %p184
    %p186 = scmp.ne.s32.totalorder %s174, %s175
    %p187 = scmp.eq.s32.totalorder %s20, 1
    %p188 = por %p186, %p187
    %p190 = scmp.ne.s32.totalorder %s175, %s189
    %p191 = scmp.eq.s32.totalorder %s20, 0
    %p192 = por %p190, %p191
    %s194 = sadd.s32 %s193, 1
    %p197 = scmp.eq.s32.totalorder %s14, 1
    %p198 = scmp.ne.s32.totalorder %s193, %s195
    %p199 = scmp.eq.s32.totalorder %s14, 0
    %p200 = por %p198, %p199
    %p201 = scmp.ne.s32.totalorder %s193, %s195
    %p202 = scmp.eq.s32.totalorder %s19, 1
    %p203 = por %p201, %p202
    %p204 = scmp.ne.s32.totalorder %s195, %s196
    %p205 = scmp.eq.s32.totalorder %s19, 0
    %p206 = por %p204, %p205
    %p207 = scmp.ne.s32.totalorder %s195, %s196
    %p208 = scmp.eq.s32.totalorder %s20, 1
    %p209 = por %p207, %p208
    %p211 = scmp.ne.s32.totalorder %s196, %s210
    %p212 = scmp.eq.s32.totalorder %s20, 0
    %p213 = por %p211, %p212
    %s214 = ssub.s32 %s21, %s33
    %s215 = ssub.s32 %s22, %s29
    %s216 = sor.u32 %s214, %s215
    %p217 = scmp.eq.s32.totalorder %s216, 0
    %s219 = sadd.s32 %s218, 1
    %s220 = scalar_select %p217, %s218, %s219
    %p223 = pneg %p217
    %p224 = scmp.eq.s32.totalorder %s14, 1
    %p225 = por %p223, %p224
    %p226 = scmp.ne.s32.totalorder %s218, %s221
    %p227 = scmp.eq.s32.totalorder %s14, 0
    %p228 = por %p226, %p227
    %p229 = scmp.ne.s32.totalorder %s218, %s221
    %p230 = scmp.eq.s32.totalorder %s19, 1
    %p231 = por %p229, %p230
    %p232 = scmp.ne.s32.totalorder %s221, %s222
    %p233 = scmp.eq.s32.totalorder %s19, 0
    %p234 = por %p232, %p233
    %p235 = scmp.ne.s32.totalorder %s221, %s222
    %p236 = scmp.eq.s32.totalorder %s20, 1
    %p237 = por %p235, %p236
    %p239 = scmp.ne.s32.totalorder %s222, %s238
    %p240 = scmp.eq.s32.totalorder %s20, 0
    %p241 = por %p239, %p240
    %p242 = scmp.le.s32.totalorder 1, %s14
    %p243 = scmp.lt.s32.totalorder %s14, 3
    %p244 = pnand %p242, %p243
    %p245 = pneg %p244
    // Predicated region
    $region9: #{hgat_forward.19} parent=5 // pred_check
      _
    $region10: #{hgat_forward.19} parent=5 // pred_check_branch
      %247 = sbr.rel (%p244) target = $region12
    $region11: #{hgat_forward.19} parent=5 // pred_region
      %s248 = ssub.s32 %s14, 1
      // Predicated region
      $region13: #{hgat_forward.19} parent=11 // pred_check
        %p249 = pneg %p101
      $region14: #{hgat_forward.19} parent=11 // pred_check_branch
        %251 = sbr.rel (%p249) target = $region16
      $region15: #{hgat_forward.19} parent=11 // pred_region
        _
      $region16: #{hgat_forward.19} parent=11 // pred_fallthru
        _
      // Predicated region
      $region17: #{hgat_forward.19} parent=11 // pred_check
        %p252 = pneg %p122
      $region18: #{hgat_forward.19} parent=11 // pred_check_branch
        %254 = sbr.rel (%p252) target = $region20
      $region19: #{hgat_forward.19} parent=11 // pred_region
        _
      $region20: #{hgat_forward.19} parent=11 // pred_fallthru
        _
      // Predicated region
      $region21: #{hgat_forward.19} parent=11 // pred_check
        %p255 = pneg %p143
      $region22: #{hgat_forward.19} parent=11 // pred_check_branch
        %257 = sbr.rel (%p255) target = $region24
      $region23: #{hgat_forward.19} parent=11 // pred_region
        _
      $region24: #{hgat_forward.19} parent=11 // pred_fallthru
        _
      // Predicated region
      $region25: #{hgat_forward.19} parent=11 // pred_check
        %p258 = pneg %p164
      $region26: #{hgat_forward.19} parent=11 // pred_check_branch
        %260 = sbr.rel (%p258) target = $region28
      $region27: #{hgat_forward.19} parent=11 // pred_region
        _
      $region28: #{hgat_forward.19} parent=11 // pred_fallthru
        _
      // Predicated region
      $region29: #{hgat_forward.19} parent=11 // pred_check
        %p261 = pneg %p185
      $region30: #{hgat_forward.19} parent=11 // pred_check_branch
        %263 = sbr.rel (%p261) target = $region32
      $region31: #{hgat_forward.19} parent=11 // pred_region
        _
      $region32: #{hgat_forward.19} parent=11 // pred_fallthru
        _
      // Predicated region
      $region33: #{hgat_forward.19} parent=11 // pred_check
        %p264 = pneg %p206
      $region34: #{hgat_forward.19} parent=11 // pred_check_branch
        %266 = sbr.rel (%p264) target = $region36
      $region35: #{hgat_forward.19} parent=11 // pred_region
        _
      $region36: #{hgat_forward.19} parent=11 // pred_fallthru
        _
    $region12: #{hgat_forward.19} parent=5 // pred_fallthru
      _
    %p267 = scmp.lt.s32.totalorder %s14, 2
    // Predicated region
    $region37: #{hgat_forward.19} parent=5 // pred_check
      %p268 = pneg %p267
    $region38: #{hgat_forward.19} parent=5 // pred_check_branch
      %270 = sbr.rel (%p268) target = $region40
    $region39: #{hgat_forward.19} parent=5 // pred_region
      // Predicated region
      $region41: #{hgat_forward.19} parent=39 // pred_check
        %p271 = pneg %p48
      $region42: #{hgat_forward.19} parent=39 // pred_check_branch
        %273 = sbr.rel (%p271) target = $region44
      $region43: #{hgat_forward.19} parent=39 // pred_region
        %p274 = scmp.lt.s32.totalorder %s21, 1
        %s275 = scalar_select %p274, %s21, 1
        %p276 = scmp.lt.s32.totalorder %s22, 0
        %s277 = scalar_select %p276, %s22, 0
        %s278 = sadd.s32 %s277, %s275
        %s279 = smul.addr %s278, 8
        %s280 = scalar_lea.vmem %s0, %s279
      $region44: #{hgat_forward.19} parent=39 // pred_fallthru
        _
      // Predicated region
      $region45: #{hgat_forward.19} parent=39 // pred_check
        %p281 = pneg %p74
      $region46: #{hgat_forward.19} parent=39 // pred_check_branch
        %283 = sbr.rel (%p281) target = $region48
      $region47: #{hgat_forward.19} parent=39 // pred_region
        %p284 = scmp.lt.s32.totalorder %s21, 1
        %s285 = scalar_select %p284, %s21, 1
        %s286 = smul.addr %s285, 8
        %s287 = scalar_lea.vmem %s1, %s286
      $region48: #{hgat_forward.19} parent=39 // pred_fallthru
        _
    $region40: #{hgat_forward.19} parent=5 // pred_fallthru
      _
    %p288 = scmp.le.s32.totalorder 1, %s14
    %p289 = scmp.lt.s32.totalorder %s14, 3
    %p290 = pnand %p288, %p289
    %p291 = pneg %p290
    // Predicated region
    $region49: #{hgat_forward.19} parent=5 // pred_check
      _
    $region50: #{hgat_forward.19} parent=5 // pred_check_branch
      %293 = sbr.rel (%p290) target = $region52
    $region51: #{hgat_forward.19} parent=5 // pred_region
      %s294 = ssub.s32 %s14, 1
      %p295 = scmp.lt.s32.totalorder %s23, 1
      %s296 = scalar_select %p295, %s23, 1
      %p297 = scmp.lt.s32.totalorder %s24, 0
      %s298 = scalar_select %p297, %s24, 0
      %s299 = sadd.s32 %s298, %s296
      %s300 = smul.addr %s299, 8
      %s301 = scalar_lea.vmem %s0, %s300
      %p302 = pneg %p54
      %p303 = pneg %p51
      %p304 = scmp.lt.s32.totalorder %s23, 1
      %s305 = scalar_select %p304, %s23, 1
      %s306 = smul.addr %s305, 8
      %s307 = scalar_lea.vmem %s1, %s306
      %p308 = pneg %p80
      %p309 = pneg %p77
      %p310 = pneg %p101
      %p311 = pneg %p98
      %p312 = pneg %p122
      %p313 = pneg %p119
      %p314 = pneg %p143
      %p315 = pneg %p140
      %p316 = pneg %p164
      %p317 = pneg %p161
      %p318 = pneg %p185
      %p319 = pneg %p182
      %p320 = pneg %p206
      %p321 = pneg %p203
      %p322 = pneg %p234
      %p323 = pneg %p231
      %p324 = scmp.lt.s32.totalorder %s23, 1
      %s325 = scalar_select %p324, %s23, 1
      %p326 = scmp.lt.s32.totalorder %s24, 0
      %s327 = scalar_select %p326, %s24, 0
      %s328 = sadd.s32 %s327, %s325
      %s329 = smul.addr %s328, 8
      %s330 = scalar_lea.vmem %s8, %s329
      %p331 = scmp.lt.s32.totalorder %s23, 1
      %s332 = scalar_select %p331, %s23, 1
      %p333 = scmp.lt.s32.totalorder %s24, 0
      %s334 = scalar_select %p333, %s24, 0
      %s335 = sadd.s32 %s334, %s332
      %s336 = smul.addr %s335, 8
      %s337 = scalar_lea.vmem %s0, %s336
      %p338 = scmp.lt.s32.totalorder %s23, 1
      %s339 = scalar_select %p338, %s23, 1
      %s340 = smul.addr %s339, 8
      %s341 = scalar_lea.vmem %s1, %s340
      %p342 = scmp.lt.s32.totalorder %s23, 1
      %s343 = scalar_select %p342, %s23, 1
      %p344 = scmp.lt.s32.totalorder %s24, 0
      %s345 = scalar_select %p344, %s24, 0
      %s346 = sadd.s32 %s345, %s343
      %s347 = smul.addr %s346, 8
      %s348 = scalar_lea.vmem %s8, %s347
      %v350 = vld [vmem:[%s337] sm:$0xff]
      %v351 = vld [vmem:[%s341] sm:$0xff]
      %v353 = vcombine.high %v350, %v350
      %v355 = vunpack.c.l.s4 1966171168
      %v356 = vunpack.c.0.s8 %v355
      %v357 = vlaneseq
      %v358 = vshrl.u32 %v357, 7
      %v359 = vsub.s32 %v356, %v358
      %v360 = vrot.slane %v350, %v359
      %v362 = vunpack.c.l.s4 1966171168
      %v363 = vunpack.c.0.s8 %v362
      %v364 = vlaneseq
      %v365 = vshrl.u32 %v364, 7
      %v366 = vsub.s32 %v363, %v365
      %v367 = vrot.slane %v353, %v366
      %v368 = vcombine.high %v360, %v360
      %v369 = vcombine.high %v367, %v367
      %v371 = vunpack.c.l.s4 1966171168
      %v372 = vunpack.c.0.s8 %v371
      %v373 = vlaneseq
      %v374 = vshrl.u32 %v373, 7
      %v375 = vsub.s32 %v372, %v374
      %v376 = vrot.slane %v360, %v375
      %v378 = vunpack.c.l.s4 1966171168
      %v379 = vunpack.c.0.s8 %v378
      %v380 = vlaneseq
      %v381 = vshrl.u32 %v380, 7
      %v382 = vsub.s32 %v379, %v381
      %v383 = vrot.slane %v367, %v382
      %v385 = vunpack.c.l.s4 1966171168
      %v386 = vunpack.c.0.s8 %v385
      %v387 = vlaneseq
      %v388 = vshrl.u32 %v387, 7
      %v389 = vsub.s32 %v386, %v388
      %v390 = vrot.slane %v368, %v389
      %v392 = vunpack.c.l.s4 1966171168
      %v393 = vunpack.c.0.s8 %v392
      %v394 = vlaneseq
      %v395 = vshrl.u32 %v394, 7
      %v396 = vsub.s32 %v393, %v395
      %v397 = vrot.slane %v369, %v396
      %v398 = vcombine.high %v376, %v376
      %v399 = vcombine.high %v383, %v383
      %v400 = vcombine.high %v390, %v390
      %v401 = vcombine.high %v397, %v397
      %v402 = vlaneseq
      %v403 = vshrl.u32 %v402, 7
      %v404 = vsub.s32 0, %v403
      %v405 = vrot.slane %v376, %v404
      %v406 = vlaneseq
      %v407 = vshrl.u32 %v406, 7
      %v408 = vsub.s32 0, %v407
      %v409 = vrot.slane %v390, %v408
      %v410 = vlaneseq
      %v411 = vshrl.u32 %v410, 7
      %v412 = vsub.s32 0, %v411
      %v413 = vrot.slane %v398, %v412
      %v414 = vlaneseq
      %v415 = vshrl.u32 %v414, 7
      %v416 = vsub.s32 0, %v415
      %v417 = vrot.slane %v400, %v416
      %v418 = vlaneseq
      %v419 = vshrl.u32 %v418, 7
      %v420 = vsub.s32 0, %v419
      %v421 = vrot.slane %v383, %v420
      %v422 = vlaneseq
      %v423 = vshrl.u32 %v422, 7
      %v424 = vsub.s32 0, %v423
      %v425 = vrot.slane %v397, %v424
      %v426 = vlaneseq
      %v427 = vshrl.u32 %v426, 7
      %v428 = vsub.s32 0, %v427
      %v429 = vrot.slane %v399, %v428
      %v430 = vlaneseq
      %v431 = vshrl.u32 %v430, 7
      %v432 = vsub.s32 0, %v431
      %v433 = vrot.slane %v401, %v432
      %v442 = vadd.f32 %v405, %v351
      %v443 = vadd.f32 %v409, %v351
      %v444 = vadd.f32 %v413, %v351
      %v445 = vadd.f32 %v417, %v351
      %v446 = vadd.f32 %v421, %v351
      %v447 = vadd.f32 %v425, %v351
      %v448 = vadd.f32 %v429, %v351
      %v449 = vadd.f32 %v433, %v351
      %v450 = vmax.f32 %v442, 0.0
      %v451 = vmax.f32 %v443, 0.0
      %v452 = vmax.f32 %v444, 0.0
      %v453 = vmax.f32 %v445, 0.0
      %v454 = vmax.f32 %v446, 0.0
      %v455 = vmax.f32 %v447, 0.0
      %v456 = vmax.f32 %v448, 0.0
      %v457 = vmax.f32 %v449, 0.0
      %v458 = vpack.c.bf16 %v451, %v450
      %v459 = vpack.c.bf16 %v453, %v452
      %v460 = vpack.c.bf16 %v455, %v454
      %v461 = vpack.c.bf16 %v457, %v456
      %v462 = vld [vmem:[%s2] sm:$0xf]
      %v463 = vld [vmem:[%s2 + $0x4] sm:$0xf]
      %v464 = vld [vmem:[%s2 + $0x8] sm:$0xf]
      %v465 = vld [vmem:[%s2 + $0xc] sm:$0xf]
      %v466 = vld [vmem:[%s2 + $0x10] sm:$0xf]
      %v467 = vld [vmem:[%s2 + $0x14] sm:$0xf]
      %v468 = vld [vmem:[%s2 + $0x18] sm:$0xf]
      %v469 = vld [vmem:[%s2 + $0x1c] sm:$0xf]
      %v470 = vld [vmem:[%s2 + $0x20] sm:$0xf]
      %v471 = vld [vmem:[%s2 + $0x24] sm:$0xf]
      %v472 = vld [vmem:[%s2 + $0x28] sm:$0xf]
      %v473 = vld [vmem:[%s2 + $0x2c] sm:$0xf]
      %v474 = vld [vmem:[%s2 + $0x30] sm:$0xf]
      %v475 = vld [vmem:[%s2 + $0x34] sm:$0xf]
      %v476 = vld [vmem:[%s2 + $0x38] sm:$0xf]
      %v477 = vld [vmem:[%s2 + $0x3c] sm:$0xf]
      %v478 = vld [vmem:[%s3] sm:$0x1]
      %v480 = vlaneseq
      %v481 = vshrl.u32 %v480, 7
      %v482 = vsub.s32 0, %v481
      %v483 = vrot.slane %v478, %v482
      %v501 = vunpack.c.l.b16 %v462
      %v502 = vunpack.c.l.b16 %v463
      %v503 = vunpack.c.l.b16 %v464
      %v504 = vunpack.c.l.b16 %v465
      %v505 = vunpack.c.l.b16 %v466
      %v506 = vunpack.c.l.b16 %v467
      %v507 = vunpack.c.l.b16 %v468
      %v508 = vunpack.c.l.b16 %v469
      %v509 = vunpack.c.l.b16 %v470
      %v510 = vunpack.c.l.b16 %v471
      %v511 = vunpack.c.l.b16 %v472
      %v512 = vunpack.c.l.b16 %v473
      %v513 = vunpack.c.l.b16 %v474
      %v514 = vunpack.c.l.b16 %v475
      %v515 = vunpack.c.l.b16 %v476
      %v516 = vunpack.c.l.b16 %v477
      %v517 = vpack.c.b16 %v502, %v501
      %v518 = vpack.c.b16 %v504, %v503
      %v519 = vpack.c.b16 %v506, %v505
      %v520 = vpack.c.b16 %v508, %v507
      %v521 = vpack.c.b16 %v510, %v509
      %v522 = vpack.c.b16 %v512, %v511
      %v523 = vpack.c.b16 %v514, %v513
      %v524 = vpack.c.b16 %v516, %v515
      %533 = vmatprep.subr.bf16.mxu0 0
      %534 = vmatpush1.bf16.msra.mxu0 %v517
      %535 = vmatprep.subr.bf16.mxu0 0
      %536 = vmatpush1.bf16.msra.mxu0 %v518
      %537 = vmatprep.subr.bf16.mxu0 0
      %538 = vmatpush1.bf16.msra.mxu0 %v519
      %539 = vmatprep.subr.bf16.mxu0 0
      %540 = vmatpush1.bf16.msra.mxu0 %v520
      %541 = vmatprep.subr.bf16.mxu0 0
      %542 = vmatpush1.bf16.msra.mxu0 %v521
      %543 = vmatprep.subr.bf16.mxu0 0
      %544 = vmatpush1.bf16.msra.mxu0 %v522
      %545 = vmatprep.subr.bf16.mxu0 0
      %546 = vmatpush1.bf16.msra.mxu0 %v523
      %547 = vmatprep.subr.bf16.mxu0 0
      %548 = vmatpush1.bf16.msra.mxu0 %v524
      %549 = vmatprep.subr.bf16.mxu0 0
      %550 = vmatpush1.bf16.msra.mxu0 0
      %551 = vmatprep.subr.bf16.mxu0 0
      %552 = vmatpush1.bf16.msra.mxu0 0
      %553 = vmatprep.subr.bf16.mxu0 0
      %554 = vmatpush1.bf16.msra.mxu0 0
      %555 = vmatprep.subr.bf16.mxu0 0
      %556 = vmatpush1.bf16.msra.mxu0 0
      %557 = vmatprep.subr.bf16.mxu0 0
      %558 = vmatpush1.bf16.msra.mxu0 0
      %559 = vmatprep.subr.bf16.mxu0 0
      %560 = vmatpush1.bf16.msra.mxu0 0
      %561 = vmatprep.subr.bf16.mxu0 0
      %562 = vmatpush1.bf16.msra.mxu0 0
      %563 = vmatprep.subr.bf16.mxu0 0
      %564 = vmatpush1.bf16.msra.mxu0 0
      %565 = vmatprep.mubr.bf16.mxu0 0
      %566 = vmatmul.mubr.bf16.gmra.mrb[0].mxu0 %v458
      %v567 = vpop.f32.mrb[0].mxu0
      %v568 = vadd.f32 %v483, %v567
      %v569 = vpop.f32.mrb[0].mxu0
      %v570 = vpop.f32.mrb[0].mxu0
      %v571 = vadd.f32 %v483, %v570
      %v572 = vpop.f32.mrb[0].mxu0
      %573 = vmatprep.mubr.bf16.mxu0 0
      %574 = vmatmul.mubr.bf16.gmra.mrb[0].mxu0 %v459
      %v575 = vpop.f32.mrb[0].mxu0
      %v576 = vadd.f32 %v483, %v575
      %v577 = vpop.f32.mrb[0].mxu0
      %v578 = vpop.f32.mrb[0].mxu0
      %v579 = vadd.f32 %v483, %v578
      %v580 = vpop.f32.mrb[0].mxu0
      %581 = vmatprep.mubr.bf16.mxu0 0
      %582 = vmatmul.mubr.bf16.gmra.mrb[0].mxu0 %v460
      %v583 = vpop.f32.mrb[0].mxu0
      %v584 = vadd.f32 %v483, %v583
      %v585 = vpop.f32.mrb[0].mxu0
      %v586 = vpop.f32.mrb[0].mxu0
      %v587 = vadd.f32 %v483, %v586
      %v588 = vpop.f32.mrb[0].mxu0
      %589 = vmatprep.mubr.bf16.mxu0 0
      %590 = vmatmul.mubr.bf16.gmra.mrb[0].mxu0 %v461
      %v591 = vpop.f32.mrb[0].mxu0
      %v592 = vadd.f32 %v483, %v591
      %v593 = vpop.f32.mrb[0].mxu0
      %v594 = vpop.f32.mrb[0].mxu0
      %v595 = vadd.f32 %v483, %v594
      %v596 = vpop.f32.mrb[0].mxu0
      %597 = vdwg.mxu0
      %v598 = vmax.f32 %v568, 0.0
      %v599 = vmax.f32 %v571, 0.0
      %v600 = vmax.f32 %v576, 0.0
      %v601 = vmax.f32 %v579, 0.0
      %v602 = vmax.f32 %v584, 0.0
      %v603 = vmax.f32 %v587, 0.0
      %v604 = vmax.f32 %v592, 0.0
      %v605 = vmax.f32 %v595, 0.0
      %v606 = vpack.c.bf16 %v599, %v598
      %v607 = vpack.c.bf16 %v601, %v600
      %v608 = vpack.c.bf16 %v603, %v602
      %v609 = vpack.c.bf16 %v605, %v604
      %v610 = vld [vmem:[%s4] sm:$0xf]
      %v611 = vld [vmem:[%s4 + $0x4] sm:$0xf]
      %v612 = vld [vmem:[%s4 + $0x8] sm:$0xf]
      %v613 = vld [vmem:[%s4 + $0xc] sm:$0xf]
      %v614 = vld [vmem:[%s4 + $0x10] sm:$0xf]
      %v615 = vld [vmem:[%s4 + $0x14] sm:$0xf]
      %v616 = vld [vmem:[%s4 + $0x18] sm:$0xf]
      %v617 = vld [vmem:[%s4 + $0x1c] sm:$0xf]
      %v618 = vld [vmem:[%s4 + $0x20] sm:$0xf]
      %v619 = vld [vmem:[%s4 + $0x24] sm:$0xf]
      %v620 = vld [vmem:[%s4 + $0x28] sm:$0xf]
      %v621 = vld [vmem:[%s4 + $0x2c] sm:$0xf]
      %v622 = vld [vmem:[%s4 + $0x30] sm:$0xf]
      %v623 = vld [vmem:[%s4 + $0x34] sm:$0xf]
      %v624 = vld [vmem:[%s4 + $0x38] sm:$0xf]
      %v625 = vld [vmem:[%s4 + $0x3c] sm:$0xf]
      %v626 = vld [vmem:[%s5] sm:$0x1]
      %v628 = vlaneseq
      %v629 = vshrl.u32 %v628, 7
      %v630 = vsub.s32 0, %v629
      %v631 = vrot.slane %v626, %v630
      %v649 = vunpack.c.l.b16 %v610
      %v650 = vunpack.c.l.b16 %v611
      %v651 = vunpack.c.l.b16 %v612
      %v652 = vunpack.c.l.b16 %v613
      %v653 = vunpack.c.l.b16 %v614
      %v654 = vunpack.c.l.b16 %v615
      %v655 = vunpack.c.l.b16 %v616
      %v656 = vunpack.c.l.b16 %v617
      %v657 = vunpack.c.l.b16 %v618
      %v658 = vunpack.c.l.b16 %v619
      %v659 = vunpack.c.l.b16 %v620
      %v660 = vunpack.c.l.b16 %v621
      %v661 = vunpack.c.l.b16 %v622
      %v662 = vunpack.c.l.b16 %v623
      %v663 = vunpack.c.l.b16 %v624
      %v664 = vunpack.c.l.b16 %v625
      %v665 = vpack.c.b16 %v650, %v649
      %v666 = vpack.c.b16 %v652, %v651
      %v667 = vpack.c.b16 %v654, %v653
      %v668 = vpack.c.b16 %v656, %v655
      %v669 = vpack.c.b16 %v658, %v657
      %v670 = vpack.c.b16 %v660, %v659
      %v671 = vpack.c.b16 %v662, %v661
      %v672 = vpack.c.b16 %v664, %v663
      %681 = vmatprep.subr.bf16.mxu0 0
      %682 = vmatpush1.bf16.msra.mxu0 %v665
      %683 = vmatprep.subr.bf16.mxu0 0
      %684 = vmatpush1.bf16.msra.mxu0 %v666
      %685 = vmatprep.subr.bf16.mxu0 0
      %686 = vmatpush1.bf16.msra.mxu0 %v667
      %687 = vmatprep.subr.bf16.mxu0 0
      %688 = vmatpush1.bf16.msra.mxu0 %v668
      %689 = vmatprep.subr.bf16.mxu0 0
      %690 = vmatpush1.bf16.msra.mxu0 %v669
      %691 = vmatprep.subr.bf16.mxu0 0
      %692 = vmatpush1.bf16.msra.mxu0 %v670
      %693 = vmatprep.subr.bf16.mxu0 0
      %694 = vmatpush1.bf16.msra.mxu0 %v671
      %695 = vmatprep.subr.bf16.mxu0 0
      %696 = vmatpush1.bf16.msra.mxu0 %v672
      %697 = vmatprep.subr.bf16.mxu0 0
      %698 = vmatpush1.bf16.msra.mxu0 0
      %699 = vmatprep.subr.bf16.mxu0 0
      %700 = vmatpush1.bf16.msra.mxu0 0
      %701 = vmatprep.subr.bf16.mxu0 0
      %702 = vmatpush1.bf16.msra.mxu0 0
      %703 = vmatprep.subr.bf16.mxu0 0
      %704 = vmatpush1.bf16.msra.mxu0 0
      %705 = vmatprep.subr.bf16.mxu0 0
      %706 = vmatpush1.bf16.msra.mxu0 0
      %707 = vmatprep.subr.bf16.mxu0 0
      %708 = vmatpush1.bf16.msra.mxu0 0
      %709 = vmatprep.subr.bf16.mxu0 0
      %710 = vmatpush1.bf16.msra.mxu0 0
      %711 = vmatprep.subr.bf16.mxu0 0
      %712 = vmatpush1.bf16.msra.mxu0 0
      %713 = vmatprep.mubr.bf16.mxu0 0
      %714 = vmatmul.mubr.bf16.gmra.mrb[0].mxu0 %v606
      %v715 = vpop.f32.mrb[0].mxu0
      %v716 = vadd.f32 %v631, %v715
      %v717 = vpop.f32.mrb[0].mxu0
      %v718 = vpop.f32.mrb[0].mxu0
      %v719 = vadd.f32 %v631, %v718
      %v720 = vpop.f32.mrb[0].mxu0
      %721 = vmatprep.mubr.bf16.mxu0 0
      %722 = vmatmul.mubr.bf16.gmra.mrb[0].mxu0 %v607
      %v723 = vpop.f32.mrb[0].mxu0
      %v724 = vadd.f32 %v631, %v723
      %v725 = vpop.f32.mrb[0].mxu0
      %v726 = vpop.f32.mrb[0].mxu0
      %v727 = vadd.f32 %v631, %v726
      %v728 = vpop.f32.mrb[0].mxu0
      %729 = vmatprep.mubr.bf16.mxu0 0
      %730 = vmatmul.mubr.bf16.gmra.mrb[0].mxu0 %v608
      %v731 = vpop.f32.mrb[0].mxu0
      %v732 = vadd.f32 %v631, %v731
      %v733 = vpop.f32.mrb[0].mxu0
      %v734 = vpop.f32.mrb[0].mxu0
      %v735 = vadd.f32 %v631, %v734
      %v736 = vpop.f32.mrb[0].mxu0
      %737 = vmatprep.mubr.bf16.mxu0 0
      %738 = vmatmul.mubr.bf16.gmra.mrb[0].mxu0 %v609
      %v739 = vpop.f32.mrb[0].mxu0
      %v740 = vadd.f32 %v631, %v739
      %v741 = vpop.f32.mrb[0].mxu0
      %v742 = vpop.f32.mrb[0].mxu0
      %v743 = vadd.f32 %v631, %v742
      %v744 = vpop.f32.mrb[0].mxu0
      %745 = vdwg.mxu0
      %v746 = vmax.f32 %v716, 0.0
      %v747 = vmax.f32 %v719, 0.0
      %v748 = vmax.f32 %v724, 0.0
      %v749 = vmax.f32 %v727, 0.0
      %v750 = vmax.f32 %v732, 0.0
      %v751 = vmax.f32 %v735, 0.0
      %v752 = vmax.f32 %v740, 0.0
      %v753 = vmax.f32 %v743, 0.0
      %v754 = vld [vmem:[%s6] sm:$0xf]
      %v755 = vpack.c.bf16 %v747, %v746
      %v756 = vpack.c.bf16 %v749, %v748
      %v757 = vpack.c.bf16 %v751, %v750
      %v758 = vpack.c.bf16 %v753, %v752
      %v759 = vld [vmem:[%s7] sm:$0xff]
      %761 = vset.pattern.permute.xlu0 0
      %762 = vperm.xlu0 %761, %v759
      %v763 = vpop.permute.xlu0 %762
      %765 = vmatprep.subr.bf16.mxu0 0
      %766 = vmatpush1.bf16.xpose.msra.mxu0 %v755
      %767 = vmatprep.subr.bf16.mxu0 0
      %768 = vmatpush1.bf16.xpose.msra.mxu0 %v756
      %769 = vmatprep.subr.bf16.mxu0 0
      %770 = vmatpush1.bf16.xpose.msra.mxu0 %v757
      %771 = vmatprep.subr.bf16.mxu0 0
      %772 = vmatpush1.bf16.xpose.msra.mxu0 %v758
      %773 = vmatprep.subr.bf16.mxu0 0
      %774 = vmatpush1.bf16.xpose.msra.mxu0 0
      %775 = vmatprep.subr.bf16.mxu0 0
      %776 = vmatpush1.bf16.xpose.msra.mxu0 0
      %777 = vmatprep.subr.bf16.mxu0 0
      %778 = vmatpush1.bf16.xpose.msra.mxu0 0
      %779 = vmatprep.subr.bf16.mxu0 0
      %780 = vmatpush1.bf16.xpose.msra.mxu0 0
      %781 = vmatprep.subr.bf16.mxu0 0
      %782 = vmatpush1.bf16.xpose.msra.mxu0 0
      %783 = vmatprep.subr.bf16.mxu0 0
      %784 = vmatpush1.bf16.xpose.msra.mxu0 0
      %785 = vmatprep.subr.bf16.mxu0 0
      %786 = vmatpush1.bf16.xpose.msra.mxu0 0
      %787 = vmatprep.subr.bf16.mxu0 0
      %788 = vmatpush1.bf16.xpose.msra.mxu0 0
      %789 = vmatprep.subr.bf16.mxu0 0
      %790 = vmatpush1.bf16.xpose.msra.mxu0 0
      %791 = vmatprep.subr.bf16.mxu0 0
      %792 = vmatpush1.bf16.xpose.msra.mxu0 0
      %793 = vmatprep.subr.bf16.mxu0 0
      %794 = vmatpush1.bf16.xpose.msra.mxu0 0
      %795 = vmatprep.subr.bf16.mxu0 0
      %796 = vmatpush1.bf16.xpose.msra.mxu0 0
      %797 = vmatprep.mubr.bf16.mxu0 0
      %798 = vmatmul.mubr.bf16.gmra.mrb[0].mxu0 %v754
      %v799 = vpop.f32.mrb[0].mxu0
      %v800 = vadd.f32 %v763, %v799
      %v801 = vpop.f32.mrb[0].mxu0
      %v802 = vpop.f32.mrb[0].mxu0
      %v803 = vpop.f32.mrb[0].mxu0
      %804 = vdwg.mxu0
      %vm805 = vcmask 523264
      %806 = vst.msk [vmem:[%s348] sm:$0xff] %vm805, %v800
      %p807 = scmp.lt.s32.totalorder %s23, 1
      %s808 = scalar_select %p807, %s23, 1
      %p809 = scmp.lt.s32.totalorder %s24, 0
      %s810 = scalar_select %p809, %s24, 0
      %s811 = sadd.s32 %s810, %s808
      %s812 = smul.addr %s811, 8
      %s813 = scalar_lea.vmem %s8, %s812
      // Predicated region
      $region53: #{hgat_forward.19} parent=51 // pred_check
        %p814 = pneg %p231
      $region54: #{hgat_forward.19} parent=51 // pred_check_branch
        %816 = sbr.rel (%p814) target = $region56
      $region55: #{hgat_forward.19} parent=51 // pred_region
        _
      $region56: #{hgat_forward.19} parent=51 // pred_fallthru
        _
    $region52: #{hgat_forward.19} parent=5 // pred_fallthru
      _
    %p817 = scmp.le.s32.totalorder 2, %s14
    // Predicated region
    $region57: #{hgat_forward.19} parent=5 // pred_check
      %p818 = pneg %p817
    $region58: #{hgat_forward.19} parent=5 // pred_check_branch
      %820 = sbr.rel (%p818) target = $region60
    $region59: #{hgat_forward.19} parent=5 // pred_region
      %s821 = ssub.s32 %s14, 2
      // Predicated region
      $region61: #{hgat_forward.19} parent=59 // pred_check
        %p822 = pneg %p237
      $region62: #{hgat_forward.19} parent=59 // pred_check_branch
        %824 = sbr.rel (%p822) target = $region64
      $region63: #{hgat_forward.19} parent=59 // pred_region
        %p825 = scmp.lt.s32.totalorder %s25, 1
        %s826 = scalar_select %p825, %s25, 1
        %p827 = scmp.lt.s32.totalorder %s26, 0
        %s828 = scalar_select %p827, %s26, 0
        %s829 = sadd.s32 %s828, %s826
        %s830 = smul.addr %s829, 8
        %s831 = scalar_lea.vmem %s8, %s830
      $region64: #{hgat_forward.19} parent=59 // pred_fallthru
        _
    $region60: #{hgat_forward.19} parent=5 // pred_fallthru
      _
  $region6: #{hgat_forward.19} parent=0 // loop_footer
    %s18 = sadd.s32 1, %s14
  $region7: #{hgat_forward.19} parent=0 // loop_footer_branch
    %13 = sbr.rel target = $region3
  $region8: #{hgat_forward.19} parent=0 // loop_exit
    _

</llo_original>
